<compile_context>
chip_gen: v7x
topology: tpu7x:2x2x1
jax: 0.10.0
libtpu: 0.0.40
codegen_flags: <defaults>
</compile_context>

<pallas_src>
import functools

import jax
import jax.numpy as jnp
from jax.experimental import pallas as pl
from jax.experimental.pallas import tpu as pltpu

KSIZE = 7
PAD = (KSIZE - 1) // 2  # 3


# ----------------------------- MXU (matmul) path ------------------------------


def spatial_attention_mxu_kernel(b_ref, x_ref, k_ref, o_ref):
    # b_ref: SMEM (1,)       f32  -- folded BN bias
    # x_ref: VMEM (Bn,C,HW)       -- input block
    # k_ref: VMEM (2*HW,HW)  f32  -- BN-folded conv matrix (resident across steps)
    # o_ref: VMEM (Bn,HW)
    Bn, C, HW = x_ref.shape
    x = x_ref[...].astype(jnp.float32)

    # ChannelPool: [max over C, mean over C] -> two lane-dense (Bn, HW) maps.
    cmax = jnp.max(x, axis=1)
    cmean = jnp.sum(x, axis=1) * (1.0 / C)

    # 7x7 "same" conv (2 in-ch -> 1 out-ch) as two MXU matmuls against the
    # precomputed, border-zeroed, BN-folded conv matrix.
    k0 = k_ref[0:HW, :]          # rows for the channel-max map
    k1 = k_ref[HW:2 * HW, :]     # rows for the channel-mean map
    y = (jnp.dot(cmax, k0, preferred_element_type=jnp.float32,
                 precision=jax.lax.Precision.HIGHEST)
         + jnp.dot(cmean, k1, preferred_element_type=jnp.float32,
                   precision=jax.lax.Precision.HIGHEST)
         + b_ref[0])
    o_ref[...] = jax.nn.sigmoid(y).astype(o_ref.dtype)


def _build_conv_matrix(w_eff, H, W):
    """BN-folded, border-zeroed conv matrix K of shape (2*H*W, H*W).

    K[c*HW + ih*W + iw, oh*W + ow] = w_eff[0, c, ih-oh+PAD, iw-ow+PAD]
    when |ih-oh| <= PAD and |iw-ow| <= PAD, else 0 (zero padding)."""
    HW = H * W
    dh = jnp.arange(H)[:, None] - jnp.arange(H)[None, :]          # (H_in, H_out)
    dw = jnp.arange(W)[:, None] - jnp.arange(W)[None, :]          # (W_in, W_out)
    vh = jnp.abs(dh) <= PAD
    vw = jnp.abs(dw) <= PAD
    kh = jnp.clip(dh + PAD, 0, KSIZE - 1)
    kw = jnp.clip(dw + PAD, 0, KSIZE - 1)
    # tap[c, ih, oh, iw, ow] = w_eff[0, c, kh[ih,oh], kw[iw,ow]]
    tap = w_eff[0][:, kh[:, :, None, None], kw[None, None, :, :]]  # (2, H, H, W, W)
    mask = vh[:, :, None, None] & vw[None, None, :, :]             # (H, H, W, W)
    tap = jnp.where(mask[None], tap, 0.0)
    # (c, ih, iw, oh, ow) -> (2*HW, HW)
    return tap.transpose(0, 1, 3, 2, 4).reshape(2 * HW, HW).astype(jnp.float32)


# --------------------------- roll/mask fallback path --------------------------


def _roll_lanes(x, delta, length):
    """Return y with y[..., i] = x[..., (i + delta) mod length] (static delta)."""
    s = (-delta) % length
    if s == 0:
        return x
    return pltpu.roll(x, s, axis=1)


def spatial_attention_roll_kernel(w_ref, b_ref, coord_ref, x_ref, o_ref, *, H, W):
    # Fallback for large H*W (when the conv matrix would not fit in VMEM).
    # w_ref:     SMEM (2, 49) f32  -- conv weight with eval-BN scale folded in
    # b_ref:     SMEM (1,)    f32  -- folded BN bias
    # coord_ref: VMEM (2, HW) i32  -- row 0: h coordinate, row 1: w coordinate
    # x_ref:     VMEM (Bn, C, HW)
    # o_ref:     VMEM (Bn, HW)
    Bn, C, HW = x_ref.shape
    x = x_ref[...].astype(jnp.float32)
    pooled = (jnp.max(x, axis=1), jnp.sum(x, axis=1) * (1.0 / C))

    # (1, HW) border masks, broadcast lazily at use time (2 vregs each instead of
    # Bn/8 vregs -> no spills at large batch blocks).
    hh = coord_ref[0:1, :]
    ww = coord_ref[1:2, :]
    h_valid = [((hh + (kh - PAD)) >= 0) & ((hh + (kh - PAD)) < H) for kh in range(KSIZE)]
    w_valid = [((ww + (kw - PAD)) >= 0) & ((ww + (kw - PAD)) < W) for kw in range(KSIZE)]

    # Hoist the 98 SMEM scalar weight reads out of the vector tap loop.
    wts = [[w_ref[c, i] for i in range(KSIZE * KSIZE)] for c in range(2)]

    # One independent partial accumulator per (channel, kh) band breaks the serial
    # mul/add dependency chain so the VALUs can fill.
    partials = []
    for c in range(2):
        pc = pooled[c]
        for kh in range(KSIZE):
            dh = kh - PAD
            band = _roll_lanes(pc, dh * W, HW)            # rows shifted by dh
            band = jnp.where(h_valid[kh], band, 0.0)      # zero padding in H
            acc_k = None
            for kw in range(KSIZE):
                dw = kw - PAD
                tap = _roll_lanes(band, dw, HW)           # lane shift within a row
                tap = jnp.where(w_valid[kw], tap, 0.0)    # zero padding in W
                term = tap * wts[c][kh * KSIZE + kw]
                acc_k = term if acc_k is None else acc_k + term
            partials.append(acc_k)
    while len(partials) > 1:                              # balanced pairwise sum
        partials = [partials[i] + partials[i + 1] if i + 1 < len(partials) else partials[i]
                    for i in range(0, len(partials), 2)]
    acc = partials[0] + b_ref[0]
    o_ref[...] = jax.nn.sigmoid(acc).astype(o_ref.dtype)


# ----------------------------------- wrapper ----------------------------------


def _pick_batch_block(N, C, HW, itemsize, vmem_limit):
    """Largest batch block (multiple of 8 dividing N, or N itself) fitting the
    budget; prefer >= 2 grid steps so both v7x TensorCores get a 'parallel' step."""
    c_pad = -(-C // 8) * 8                                # sublane padding of C

    def fits(b):
        in_bytes = 2 * b * c_pad * HW * itemsize          # double-buffered x block
        tmp_bytes = 8 * b * HW * 4                        # f32 pooled / conv temporaries
        return in_bytes + tmp_bytes <= vmem_limit // 2

    cands = [d for d in range(8, N + 1, 8) if N % d == 0]
    fitting = [d for d in cands if fits(d)]
    multi = [d for d in fitting if N // d >= 2]
    if multi:
        return max(multi)
    if fitting:
        return max(fitting)
    if cands:
        return min(cands)  # TODO(synk): stream over C / split HW if even this overflows VMEM
    return N               # small batch: whole batch per grid step


def spatial_attention(x, conv_w, bn_gamma, bn_beta, bn_mean, bn_var, eps=1e-5):
    """x: (N, C, H, W). Returns the sigmoid attention map, shape (N, 1, H, W)."""
    N, C, H, W = x.shape
    HW = H * W

    # Fold eval-mode BatchNorm (single output channel) into the conv:
    #   y = gamma * (conv(x) - mean) / sqrt(var + eps) + beta
    scale = bn_gamma / jnp.sqrt(bn_var + eps)                            # (1,)
    w_eff = (conv_w * scale[:, None, None, None]).astype(jnp.float32)    # (1, 2, 7, 7)
    b_eff = (bn_beta - scale * bn_mean).astype(jnp.float32)              # (1,)

    # Lane-dense presentation: last dim is H*W for both the input and the output.
    x_flat = x.reshape(N, C, HW)

    # Generation-aware VMEM budget (v5e/v6e: 128 MiB, v7x: 64 MiB physical).
    try:
        vmem_cap = int(pltpu.get_tpu_info().vmem_capacity_bytes)
    except Exception:
        vmem_cap = 64 << 20
    vmem_limit = min(int(vmem_cap * 0.85), 110 << 20)

    bn_blk = _pick_batch_block(N, C, HW, jnp.dtype(x.dtype).itemsize, vmem_limit)
    grid = (N // bn_blk,)
    cparams = pltpu.CompilerParams(
        dimension_semantics=("parallel",),
        vmem_limit_bytes=vmem_limit,
    )

    k_bytes = 2 * HW * HW * 4
    if k_bytes <= max(vmem_cap // 8, 2 << 20):
        # MXU path: the 7x7 conv as a matmul against a resident (2*HW, HW) matrix.
        conv_mat = _build_conv_matrix(w_eff, H, W)
        out_flat = pl.pallas_call(
            spatial_attention_mxu_kernel,
            out_shape=jax.ShapeDtypeStruct((N, HW), x.dtype),
            grid=grid,
            in_specs=[
                pl.BlockSpec(memory_space=pltpu.MemorySpace.SMEM),        # b_eff
                pl.BlockSpec((bn_blk, C, HW), lambda n: (n, 0, 0)),       # x
                pl.BlockSpec((2 * HW, HW), lambda n: (0, 0)),             # conv matrix (resident)
            ],
            out_specs=pl.BlockSpec((bn_blk, HW), lambda n: (n, 0)),
            compiler_params=cparams,
        )(b_eff, x_flat, conv_mat)
    else:
        # Large-image fallback: roll/mask conv on the VPU/XLU.
        w_flat = w_eff[0].reshape(2, KSIZE * KSIZE)                       # (2, 49)
        flat = jnp.arange(HW, dtype=jnp.int32)
        coords = jnp.stack([flat // W, flat % W], axis=0)                 # (2, HW) i32
        kernel = functools.partial(spatial_attention_roll_kernel, H=H, W=W)
        out_flat = pl.pallas_call(
            kernel,
            out_shape=jax.ShapeDtypeStruct((N, HW), x.dtype),
            grid=grid,
            in_specs=[
                pl.BlockSpec(memory_space=pltpu.MemorySpace.SMEM),        # w_flat
                pl.BlockSpec(memory_space=pltpu.MemorySpace.SMEM),        # b_eff
                pl.BlockSpec((2, HW), lambda n: (0, 0)),                  # coords
                pl.BlockSpec((bn_blk, C, HW), lambda n: (n, 0, 0)),       # x
            ],
            out_specs=pl.BlockSpec((bn_blk, HW), lambda n: (n, 0)),
            compiler_params=cparams,
        )(w_flat, b_eff, coords, x_flat)

    return out_flat.reshape(N, 1, H, W)


# ---------------------------------- reference ---------------------------------


def reference(x, conv_w, bn_gamma, bn_beta, bn_mean, bn_var, eps=1e-5):
    pooled = jnp.concatenate(
        [jnp.max(x, axis=1, keepdims=True), jnp.mean(x, axis=1, keepdims=True)],
        axis=1,
    )
    conv = jax.lax.conv_general_dilated(
        pooled, conv_w, window_strides=(1, 1), padding=[(PAD, PAD), (PAD, PAD)],
        dimension_numbers=("NCHW", "OIHW", "NCHW"),
        precision=jax.lax.Precision.HIGHEST,
    )
    g = bn_gamma[None, :, None, None]
    b = bn_beta[None, :, None, None]
    m = bn_mean[None, :, None, None]
    v = bn_var[None, :, None, None]
    y = g * (conv - m) / jnp.sqrt(v + eps) + b
    return jax.nn.sigmoid(y)


if __name__ == "__main__":
    key = jax.random.PRNGKey(0)
    kx, kw = jax.random.split(key)

    N, C, H, W = 2, 4, 16, 16
    x = jax.random.normal(kx, (N, C, H, W), jnp.float32)

    # Deterministic parameter init (conv weight ~ PyTorch kaiming-uniform bound).
    fan_in = 2 * KSIZE * KSIZE
    bound = 1.0 / (fan_in ** 0.5)
    conv_w = jax.random.uniform(kw, (1, 2, KSIZE, KSIZE), jnp.float32, -bound, bound)
    # BatchNorm2d(1) parameters / running stats (eval-mode BN).
    bn_gamma = jnp.array([1.2], jnp.float32)
    bn_beta = jnp.array([0.1], jnp.float32)
    bn_mean = jnp.array([0.05], jnp.float32)
    bn_var = jnp.array([0.9], jnp.float32)

    out = spatial_attention(x, conv_w, bn_gamma, bn_beta, bn_mean, bn_var)
    out = jax.block_until_ready(out)

    ref = reference(x, conv_w, bn_gamma, bn_beta, bn_mean, bn_var)
    assert out.shape == (N, 1, H, W)
    assert jnp.allclose(out, ref, atol=2e-4, rtol=1e-4), "mismatch vs reference"
    print("KERNEL_OK")
</pallas_src>

<mosaic_0001>
module attributes {stable_mosaic.version = 11 : i64} {
  func.func @spatial_attention_mxu_kernel(%arg0: i32, %arg1: memref<1xf32, #tpu.memory_space<smem>>, %arg2: memref<2x4x256xf32, #tpu.memory_space<vmem>>, %arg3: memref<512x256xf32, #tpu.memory_space<vmem>>, %arg4: memref<2x256xf32, #tpu.memory_space<vmem>>) attributes {dimension_semantics = [#tpu.dimension_semantics<parallel>], iteration_bounds = array<i64: 1>, scalar_prefetch = 0 : i64, scratch_operands = 0 : i64, tpu.core_type = #tpu.core_type<tc>, window_params = [{transform_indices = @transform_0, window_bounds = array<i64: 1>}, {transform_indices = @transform_1, window_bounds = array<i64: 2, 4, 256>}, {pipeline_mode = #tpu.pipeline_mode<synchronous>, transform_indices = @transform_2, window_bounds = array<i64: 512, 256>}, {transform_indices = @transform_3, window_bounds = array<i64: 2, 256>}]} {
    %c0 = arith.constant 0 : index
    %c0_0 = arith.constant 0 : index
    %c0_1 = arith.constant 0 : index
    %0 = vector.load %arg2[%c0, %c0_0, %c0_1] : memref<2x4x256xf32, #tpu.memory_space<vmem>>, vector<2x4x256xf32>
    %cst = arith.constant dense<0xFF800000> : vector<2x256xf32>
    %1 = vector.multi_reduction <maximumf>, %0, %cst [1] : vector<2x4x256xf32> to vector<2x256xf32>
    %cst_2 = arith.constant dense<0.000000e+00> : vector<2x256xf32>
    %2 = vector.multi_reduction <add>, %0, %cst_2 [1] : vector<2x4x256xf32> to vector<2x256xf32>
    %cst_3 = arith.constant 2.500000e-01 : f32
    %3 = vector.broadcast %cst_3 : f32 to vector<2x256xf32>
    %4 = arith.mulf %2, %3 : vector<2x256xf32>
    %c0_4 = arith.constant 0 : index
    %c0_5 = arith.constant 0 : index
    %5 = vector.load %arg3[%c0_4, %c0_5] : memref<512x256xf32, #tpu.memory_space<vmem>>, vector<256x256xf32>
    %c256 = arith.constant 256 : index
    %c0_6 = arith.constant 0 : index
    %6 = vector.load %arg3[%c256, %c0_6] : memref<512x256xf32, #tpu.memory_space<vmem>>, vector<256x256xf32>
    %cst_7 = arith.constant dense<0.000000e+00> : vector<2x256xf32>
    %7 = tpu.matmul %1, %5, %cst_7 {dimension_numbers = #tpu.dot_dimension_numbers<[1], [0], [0], [1], [0, 0, 1, 1], [], []>, precision = #tpu.contract_precision<fp32>} : vector<2x256xf32>, vector<256x256xf32>, vector<2x256xf32> -> vector<2x256xf32>
    %cst_8 = arith.constant dense<0.000000e+00> : vector<2x256xf32>
    %8 = tpu.matmul %4, %6, %cst_8 {dimension_numbers = #tpu.dot_dimension_numbers<[1], [0], [0], [1], [0, 0, 1, 1], [], []>, precision = #tpu.contract_precision<fp32>} : vector<2x256xf32>, vector<256x256xf32>, vector<2x256xf32> -> vector<2x256xf32>
    %9 = arith.addf %7, %8 : vector<2x256xf32>
    %c0_9 = arith.constant 0 : index
    %10 = memref.load %arg1[%c0_9] : memref<1xf32, #tpu.memory_space<smem>>
    %11 = vector.broadcast %10 : f32 to vector<2x256xf32>
    %12 = arith.addf %9, %11 : vector<2x256xf32>
    %13 = arith.negf %12 : vector<2x256xf32>
    %14 = math.exp %13 : vector<2x256xf32>
    %cst_10 = arith.constant 1.000000e+00 : f32
    %15 = vector.broadcast %cst_10 : f32 to vector<2x256xf32>
    %16 = arith.addf %15, %14 : vector<2x256xf32>
    %17 = arith.divf %15, %16 : vector<2x256xf32>
    %c0_11 = arith.constant 0 : index
    %c0_12 = arith.constant 0 : index
    %18 = vector.load %arg4[%c0_11, %c0_12] : memref<2x256xf32, #tpu.memory_space<vmem>>, vector<2x256xf32>
    tpu.vector_store %arg4[%c0_11, %c0_12], %17 {strides = array<i32>} : memref<2x256xf32, #tpu.memory_space<vmem>>, vector<2x256xf32>,
    return
  }
  func.func @transform_0(%arg0: i32) -> i32 {
    %c0_i32 = arith.constant 0 : i32
    %c0_i32_0 = arith.constant 0 : i32
    return %c0_i32 : i32
  }
  func.func @transform_1(%arg0: i32) -> (i32, i32, i32) {
    %c0_i32 = arith.constant 0 : i32
    %c0_i32_0 = arith.constant 0 : i32
    %c0_i32_1 = arith.constant 0 : i32
    return %arg0, %c0_i32, %c0_i32_0 : i32, i32, i32
  }
  func.func @transform_2(%arg0: i32) -> (i32, i32) {
    %c0_i32 = arith.constant 0 : i32
    %c0_i32_0 = arith.constant 0 : i32
    %c0_i32_1 = arith.constant 0 : i32
    return %c0_i32, %c0_i32_0 : i32, i32
  }
  func.func @transform_3(%arg0: i32) -> (i32, i32) {
    %c0_i32 = arith.constant 0 : i32
    %c0_i32_0 = arith.constant 0 : i32
    return %arg0, %c0_i32 : i32, i32
  }
}

</mosaic_0001>

<llo_original>
// kernel: tpu_custom_call.1
$region0: #{tpu_custom_call.1}
  #allocation0 [shape = 'u32[]', space=smem, size = 0x4, offset = 0x4, fixed_abs, tag = 'smem constant byte address 0x4 - core index']
  #allocation1 [shape = 'u32[144,128]{1,0:T(1,128)}', space=vmem, size = 0x12000, scoped, tag = 'internal scratch']
  #allocation2 [shape = 'f32[1]{0:T(128)S(6)}', space=smem, size = 0x200, scoped, tag = 'scoped memory for tpu_custom_call.1']
  %s0 = inlined_call_operand.<no memory space> [shape: f32[1], index: 0, kind: input, shape index: {}]
  %s1 = inlined_call_operand.hbm [shape: f32[2,4,256], index: 1, kind: input, shape index: {}]
  %s2 = inlined_call_operand.hbm [shape: f32[512,256], index: 2, kind: input, shape index: {}]
  %s3 = inlined_call_operand.hbm [shape: f32[2,256], index: 3, kind: output, shape index: {}]
  %s4 = sld [smem:[#allocation0]]
  $region30: #{tpu_custom_call.1} parent=0
    _
  %s6 = ssub.s32 1, %s4
  %s7 = scalar_select 0, %s6, %s4
  %8 = sst [smem:[#allocation2]] %s0
  $region1: #{tpu_custom_call.1} parent=0
    #allocation3 [shape = 'u8[8192]{0}', space=vmem, size = 0x2000, scoped, tag = 'input window, operand 1, single buffered']
    #allocation4 [shape = 's32[1]{0}', space=sflag, size = 0x4, scoped, tag = 'scoped memory for tpu_custom_call.1']
    #allocation5 [shape = 's32[1]{0}', space=sflag, size = 0x4, scoped, tag = 'scoped memory for tpu_custom_call.1']
    #allocation6 [shape = 'u8[524288]{0}', space=vmem, size = 0x80000, scoped, tag = 'input window, operand 2, single buffered']
    #allocation7 [shape = 's32[1]{0}', space=sflag, size = 0x4, scoped, tag = 'scoped memory for tpu_custom_call.1']
    #allocation8 [shape = 'u8[2048]{0}', space=vmem, size = 0x800, scoped, tag = 'output window, operand 0, single buffered']
    %9 = vsyncpa [#allocation4], 0
    %10 = vsyncpa [#allocation7], 0
    %11 = vsyncpa [#allocation5], 0
    // Predicated region
    $region2: #{tpu_custom_call.1} parent=1 // pred_check
      _
    $region3: #{tpu_custom_call.1} parent=1 // pred_check_branch
      %13 = sbr.rel (0) target = $region5
    $region4: #{tpu_custom_call.1} parent=1 // pred_region
      _
    $region5: #{tpu_custom_call.1} parent=1 // pred_fallthru
      _
    // Predicated region
    $region6: #{tpu_custom_call.1} parent=1 // pred_check
      _
    $region7: #{tpu_custom_call.1} parent=1 // pred_check_branch
      %15 = sbr.rel (0) target = $region9
    $region8: #{tpu_custom_call.1} parent=1 // pred_region
      %s17 = ssub.s32 256, 256
      %18 = vsyncadd [#allocation4], %s17
      %s19 = sshll.u32 [#allocation3], 4
      %s20 = int_to_ptr.vmem [resolvable:$true] %s19
      %25 = dma.hbm_to_vmem [thread:$0]  %s1, 256, %s20, [#allocation4], 128, 128, 8
    $region9: #{tpu_custom_call.1} parent=1 // pred_fallthru
      _
    // Predicated region
    $region10: #{tpu_custom_call.1} parent=1 // pred_check
      _
    $region11: #{tpu_custom_call.1} parent=1 // pred_check_branch
      %27 = sbr.rel (0) target = $region13
    $region12: #{tpu_custom_call.1} parent=1 // pred_region
      %s29 = ssub.s32 16384, 16384
      %30 = vsyncadd [#allocation7], %s29
      %s31 = sshll.u32 [#allocation6], 4
      %s32 = int_to_ptr.vmem [resolvable:$true] %s31
      %37 = dma.hbm_to_vmem [thread:$0]  %s2, 16384, %s32, [#allocation7], 256, 256, 16
    $region13: #{tpu_custom_call.1} parent=1 // pred_fallthru
      _
    // Predicated region
    $region14: #{tpu_custom_call.1} parent=1 // pred_check
      _
    $region15: #{tpu_custom_call.1} parent=1 // pred_check_branch
      %39 = sbr.rel (0) target = $region17
    $region16: #{tpu_custom_call.1} parent=1 // pred_region
      %40 = dma.done [#allocation4], 256
    $region17: #{tpu_custom_call.1} parent=1 // pred_fallthru
      _
    // Predicated region
    $region18: #{tpu_custom_call.1} parent=1 // pred_check
      _
    $region19: #{tpu_custom_call.1} parent=1 // pred_check_branch
      %42 = sbr.rel (0) target = $region21
    $region20: #{tpu_custom_call.1} parent=1 // pred_region
      %43 = dma.done [#allocation7], 16384
    $region21: #{tpu_custom_call.1} parent=1 // pred_fallthru
      _
    %v44 = vld [vmem:[#allocation3] sm:$0xff]
    %v45 = vld [vmem:[#allocation3 + $0x8] sm:$0xff]
    %v48 = vcombine.high %v44, %v44
    %v49 = vcombine.high %v45, %v45
    %vm52 = vcmask 1043456
    %v53 = vsel %vm52, %v44, -inf
    %v54 = vrot.slane %v53, 4
    %v55 = vmax.f32 %v53, %v54
    %v56 = vrot.slane %v55, 2
    %v57 = vmax.f32 %v55, %v56
    %v58 = vrot.slane %v57, 1
    %v59 = vmax.f32 %v57, %v58
    %v60 = vsel %vm52, %v48, -inf
    %v61 = vrot.slane %v60, 4
    %v62 = vmax.f32 %v60, %v61
    %v63 = vrot.slane %v62, 2
    %v64 = vmax.f32 %v62, %v63
    %v65 = vrot.slane %v64, 1
    %v66 = vmax.f32 %v64, %v65
    %v67 = vsel %vm52, %v45, -inf
    %v68 = vrot.slane %v67, 4
    %v69 = vmax.f32 %v67, %v68
    %v70 = vrot.slane %v69, 2
    %v71 = vmax.f32 %v69, %v70
    %v72 = vrot.slane %v71, 1
    %v73 = vmax.f32 %v71, %v72
    %v74 = vsel %vm52, %v49, -inf
    %v75 = vrot.slane %v74, 4
    %v76 = vmax.f32 %v74, %v75
    %v77 = vrot.slane %v76, 2
    %v78 = vmax.f32 %v76, %v77
    %v79 = vrot.slane %v78, 1
    %v80 = vmax.f32 %v78, %v79
    %v81 = vsel %vm52, %v44, 0.0
    %v82 = vrot.slane %v81, 4
    %v83 = vadd.f32 %v81, %v82
    %v84 = vrot.slane %v83, 2
    %v85 = vadd.f32 %v83, %v84
    %v86 = vrot.slane %v85, 1
    %v87 = vadd.f32 %v85, %v86
    %v88 = vsel %vm52, %v48, 0.0
    %v89 = vrot.slane %v88, 4
    %v90 = vadd.f32 %v88, %v89
    %v91 = vrot.slane %v90, 2
    %v92 = vadd.f32 %v90, %v91
    %v93 = vrot.slane %v92, 1
    %v94 = vadd.f32 %v92, %v93
    %v95 = vsel %vm52, %v45, 0.0
    %v96 = vrot.slane %v95, 4
    %v97 = vadd.f32 %v95, %v96
    %v98 = vrot.slane %v97, 2
    %v99 = vadd.f32 %v97, %v98
    %v100 = vrot.slane %v99, 1
    %v101 = vadd.f32 %v99, %v100
    %v102 = vsel %vm52, %v49, 0.0
    %v103 = vrot.slane %v102, 4
    %v104 = vadd.f32 %v102, %v103
    %v105 = vrot.slane %v104, 2
    %v106 = vadd.f32 %v104, %v105
    %v107 = vrot.slane %v106, 1
    %v108 = vadd.f32 %v106, %v107
    %v109 = vmul.f32 %v87, 0.25
    %v110 = vmul.f32 %v94, 0.25
    %v111 = vmul.f32 %v101, 0.25
    %v112 = vmul.f32 %v108, 0.25
    %v113 = vld [vmem:[#allocation6] sm:$0xff]
    %v114 = vld [vmem:[#allocation6 + $0x8] sm:$0xff]
    %v115 = vld [vmem:[#allocation6 + $0x10] sm:$0xff]
    %v116 = vld [vmem:[#allocation6 + $0x18] sm:$0xff]
    %v117 = vld [vmem:[#allocation6 + $0x20] sm:$0xff]
    %v118 = vld [vmem:[#allocation6 + $0x28] sm:$0xff]
    %v119 = vld [vmem:[#allocation6 + $0x30] sm:$0xff]
    %v120 = vld [vmem:[#allocation6 + $0x38] sm:$0xff]
    %v121 = vld [vmem:[#allocation6 + $0x40] sm:$0xff]
    %v122 = vld [vmem:[#allocation6 + $0x48] sm:$0xff]
    %v123 = vld [vmem:[#allocation6 + $0x50] sm:$0xff]
    %v124 = vld [vmem:[#allocation6 + $0x58] sm:$0xff]
    %v125 = vld [vmem:[#allocation6 + $0x60] sm:$0xff]
    %v126 = vld [vmem:[#allocation6 + $0x68] sm:$0xff]
    %v127 = vld [vmem:[#allocation6 + $0x70] sm:$0xff]
    %v128 = vld [vmem:[#allocation6 + $0x78] sm:$0xff]
    %v129 = vld [vmem:[#allocation6 + $0x80] sm:$0xff]
    %v130 = vld [vmem:[#allocation6 + $0x88] sm:$0xff]
    %v131 = vld [vmem:[#allocation6 + $0x90] sm:$0xff]
    %v132 = vld [vmem:[#allocation6 + $0x98] sm:$0xff]
    %v133 = vld [vmem:[#allocation6 + $0xa0] sm:$0xff]
    %v134 = vld [vmem:[#allocation6 + $0xa8] sm:$0xff]
    %v135 = vld [vmem:[#allocation6 + $0xb0] sm:$0xff]
    %v136 = vld [vmem:[#allocation6 + $0xb8] sm:$0xff]
    %v137 = vld [vmem:[#allocation6 + $0xc0] sm:$0xff]
    %v138 = vld [vmem:[#allocation6 + $0xc8] sm:$0xff]
    %v139 = vld [vmem:[#allocation6 + $0xd0] sm:$0xff]
    %v140 = vld [vmem:[#allocation6 + $0xd8] sm:$0xff]
    %v141 = vld [vmem:[#allocation6 + $0xe0] sm:$0xff]
    %v142 = vld [vmem:[#allocation6 + $0xe8] sm:$0xff]
    %v143 = vld [vmem:[#allocation6 + $0xf0] sm:$0xff]
    %v144 = vld [vmem:[#allocation6 + $0xf8] sm:$0xff]
    %v145 = vld [vmem:[#allocation6 + $0x100] sm:$0xff]
    %v146 = vld [vmem:[#allocation6 + $0x108] sm:$0xff]
    %v147 = vld [vmem:[#allocation6 + $0x110] sm:$0xff]
    %v148 = vld [vmem:[#allocation6 + $0x118] sm:$0xff]
    %v149 = vld [vmem:[#allocation6 + $0x120] sm:$0xff]
    %v150 = vld [vmem:[#allocation6 + $0x128] sm:$0xff]
    %v151 = vld [vmem:[#allocation6 + $0x130] sm:$0xff]
    %v152 = vld [vmem:[#allocation6 + $0x138] sm:$0xff]
    %v153 = vld [vmem:[#allocation6 + $0x140] sm:$0xff]
    %v154 = vld [vmem:[#allocation6 + $0x148] sm:$0xff]
    %v155 = vld [vmem:[#allocation6 + $0x150] sm:$0xff]
    %v156 = vld [vmem:[#allocation6 + $0x158] sm:$0xff]
    %v157 = vld [vmem:[#allocation6 + $0x160] sm:$0xff]
    %v158 = vld [vmem:[#allocation6 + $0x168] sm:$0xff]
    %v159 = vld [vmem:[#allocation6 + $0x170] sm:$0xff]
    %v160 = vld [vmem:[#allocation6 + $0x178] sm:$0xff]
    %v161 = vld [vmem:[#allocation6 + $0x180] sm:$0xff]
    %v162 = vld [vmem:[#allocation6 + $0x188] sm:$0xff]
    %v163 = vld [vmem:[#allocation6 + $0x190] sm:$0xff]
    %v164 = vld [vmem:[#allocation6 + $0x198] sm:$0xff]
    %v165 = vld [vmem:[#allocation6 + $0x1a0] sm:$0xff]
    %v166 = vld [vmem:[#allocation6 + $0x1a8] sm:$0xff]
    %v167 = vld [vmem:[#allocation6 + $0x1b0] sm:$0xff]
    %v168 = vld [vmem:[#allocation6 + $0x1b8] sm:$0xff]
    %v169 = vld [vmem:[#allocation6 + $0x1c0] sm:$0xff]
    %v170 = vld [vmem:[#allocation6 + $0x1c8] sm:$0xff]
    %v171 = vld [vmem:[#allocation6 + $0x1d0] sm:$0xff]
    %v172 = vld [vmem:[#allocation6 + $0x1d8] sm:$0xff]
    %v173 = vld [vmem:[#allocation6 + $0x1e0] sm:$0xff]
    %v174 = vld [vmem:[#allocation6 + $0x1e8] sm:$0xff]
    %v175 = vld [vmem:[#allocation6 + $0x1f0] sm:$0xff]
    %v176 = vld [vmem:[#allocation6 + $0x1f8] sm:$0xff]
    %v177 = vld [vmem:[#allocation6 + $0x200] sm:$0xff]
    %v178 = vld [vmem:[#allocation6 + $0x208] sm:$0xff]
    %v179 = vld [vmem:[#allocation6 + $0x210] sm:$0xff]
    %v180 = vld [vmem:[#allocation6 + $0x218] sm:$0xff]
    %v181 = vld [vmem:[#allocation6 + $0x220] sm:$0xff]
    %v182 = vld [vmem:[#allocation6 + $0x228] sm:$0xff]
    %v183 = vld [vmem:[#allocation6 + $0x230] sm:$0xff]
    %v184 = vld [vmem:[#allocation6 + $0x238] sm:$0xff]
    %v185 = vld [vmem:[#allocation6 + $0x240] sm:$0xff]
    %v186 = vld [vmem:[#allocation6 + $0x248] sm:$0xff]
    %v187 = vld [vmem:[#allocation6 + $0x250] sm:$0xff]
    %v188 = vld [vmem:[#allocation6 + $0x258] sm:$0xff]
    %v189 = vld [vmem:[#allocation6 + $0x260] sm:$0xff]
    %v190 = vld [vmem:[#allocation6 + $0x268] sm:$0xff]
    %v191 = vld [vmem:[#allocation6 + $0x270] sm:$0xff]
    %v192 = vld [vmem:[#allocation6 + $0x278] sm:$0xff]
    %v193 = vld [vmem:[#allocation6 + $0x280] sm:$0xff]
    %v194 = vld [vmem:[#allocation6 + $0x288] sm:$0xff]
    %v195 = vld [vmem:[#allocation6 + $0x290] sm:$0xff]
    %v196 = vld [vmem:[#allocation6 + $0x298] sm:$0xff]
    %v197 = vld [vmem:[#allocation6 + $0x2a0] sm:$0xff]
    %v198 = vld [vmem:[#allocation6 + $0x2a8] sm:$0xff]
    %v199 = vld [vmem:[#allocation6 + $0x2b0] sm:$0xff]
    %v200 = vld [vmem:[#allocation6 + $0x2b8] sm:$0xff]
    %v201 = vld [vmem:[#allocation6 + $0x2c0] sm:$0xff]
    %v202 = vld [vmem:[#allocation6 + $0x2c8] sm:$0xff]
    %v203 = vld [vmem:[#allocation6 + $0x2d0] sm:$0xff]
    %v204 = vld [vmem:[#allocation6 + $0x2d8] sm:$0xff]
    %v205 = vld [vmem:[#allocation6 + $0x2e0] sm:$0xff]
    %v206 = vld [vmem:[#allocation6 + $0x2e8] sm:$0xff]
    %v207 = vld [vmem:[#allocation6 + $0x2f0] sm:$0xff]
    %v208 = vld [vmem:[#allocation6 + $0x2f8] sm:$0xff]
    %v209 = vld [vmem:[#allocation6 + $0x300] sm:$0xff]
    %v210 = vld [vmem:[#allocation6 + $0x308] sm:$0xff]
    %v211 = vld [vmem:[#allocation6 + $0x310] sm:$0xff]
    %v212 = vld [vmem:[#allocation6 + $0x318] sm:$0xff]
    %v213 = vld [vmem:[#allocation6 + $0x320] sm:$0xff]
    %v214 = vld [vmem:[#allocation6 + $0x328] sm:$0xff]
    %v215 = vld [vmem:[#allocation6 + $0x330] sm:$0xff]
    %v216 = vld [vmem:[#allocation6 + $0x338] sm:$0xff]
    %v217 = vld [vmem:[#allocation6 + $0x340] sm:$0xff]
    %v218 = vld [vmem:[#allocation6 + $0x348] sm:$0xff]
    %v219 = vld [vmem:[#allocation6 + $0x350] sm:$0xff]
    %v220 = vld [vmem:[#allocation6 + $0x358] sm:$0xff]
    %v221 = vld [vmem:[#allocation6 + $0x360] sm:$0xff]
    %v222 = vld [vmem:[#allocation6 + $0x368] sm:$0xff]
    %v223 = vld [vmem:[#allocation6 + $0x370] sm:$0xff]
    %v224 = vld [vmem:[#allocation6 + $0x378] sm:$0xff]
    %v225 = vld [vmem:[#allocation6 + $0x380] sm:$0xff]
    %v226 = vld [vmem:[#allocation6 + $0x388] sm:$0xff]
    %v227 = vld [vmem:[#allocation6 + $0x390] sm:$0xff]
    %v228 = vld [vmem:[#allocation6 + $0x398] sm:$0xff]
    %v229 = vld [vmem:[#allocation6 + $0x3a0] sm:$0xff]
    %v230 = vld [vmem:[#allocation6 + $0x3a8] sm:$0xff]
    %v231 = vld [vmem:[#allocation6 + $0x3b0] sm:$0xff]
    %v232 = vld [vmem:[#allocation6 + $0x3b8] sm:$0xff]
    %v233 = vld [vmem:[#allocation6 + $0x3c0] sm:$0xff]
    %v234 = vld [vmem:[#allocation6 + $0x3c8] sm:$0xff]
    %v235 = vld [vmem:[#allocation6 + $0x3d0] sm:$0xff]
    %v236 = vld [vmem:[#allocation6 + $0x3d8] sm:$0xff]
    %v237 = vld [vmem:[#allocation6 + $0x3e0] sm:$0xff]
    %v238 = vld [vmem:[#allocation6 + $0x3e8] sm:$0xff]
    %v239 = vld [vmem:[#allocation6 + $0x3f0] sm:$0xff]
    %v240 = vld [vmem:[#allocation6 + $0x3f8] sm:$0xff]
    %vm245 = vcmask 1041409
    %v246 = vsel %vm245, %v111, %v109
    %v247 = vsel %vm245, %v112, %v110
    %v250 = vand.u32 %v178, 4294901760
    %251 = vmatprep.subr.mxu0 %v250
    %v252 = vand.u32 %v177, 4294901760
    %253 = vmatpush1.msra.mxu0 %v252
    %v254 = vand.u32 %v180, 4294901760
    %255 = vmatprep.subr.mxu0 %v254
    %v256 = vand.u32 %v179, 4294901760
    %257 = vmatpush1.msra.mxu0 %v256
    %v258 = vand.u32 %v182, 4294901760
    %259 = vmatprep.subr.mxu0 %v258
    %v260 = vand.u32 %v181, 4294901760
    %261 = vmatpush1.msra.mxu0 %v260
    %v262 = vand.u32 %v184, 4294901760
    %263 = vmatprep.subr.mxu0 %v262
    %v264 = vand.u32 %v183, 4294901760
    %265 = vmatpush1.msra.mxu0 %v264
    %v266 = vand.u32 %v186, 4294901760
    %267 = vmatprep.subr.mxu0 %v266
    %v268 = vand.u32 %v185, 4294901760
    %269 = vmatpush1.msra.mxu0 %v268
    %v270 = vand.u32 %v188, 4294901760
    %271 = vmatprep.subr.mxu0 %v270
    %v272 = vand.u32 %v187, 4294901760
    %273 = vmatpush1.msra.mxu0 %v272
    %v274 = vand.u32 %v190, 4294901760
    %275 = vmatprep.subr.mxu0 %v274
    %v276 = vand.u32 %v189, 4294901760
    %277 = vmatpush1.msra.mxu0 %v276
    %v278 = vand.u32 %v192, 4294901760
    %279 = vmatprep.subr.mxu0 %v278
    %v280 = vand.u32 %v191, 4294901760
    %281 = vmatpush1.msra.mxu0 %v280
    %v282 = vand.u32 %v194, 4294901760
    %283 = vmatprep.subr.mxu0 %v282
    %v284 = vand.u32 %v193, 4294901760
    %285 = vmatpush1.msra.mxu0 %v284
    %v286 = vand.u32 %v196, 4294901760
    %287 = vmatprep.subr.mxu0 %v286
    %v288 = vand.u32 %v195, 4294901760
    %289 = vmatpush1.msra.mxu0 %v288
    %v290 = vand.u32 %v198, 4294901760
    %291 = vmatprep.subr.mxu0 %v290
    %v292 = vand.u32 %v197, 4294901760
    %293 = vmatpush1.msra.mxu0 %v292
    %v294 = vand.u32 %v200, 4294901760
    %295 = vmatprep.subr.mxu0 %v294
    %v296 = vand.u32 %v199, 4294901760
    %297 = vmatpush1.msra.mxu0 %v296
    %v298 = vand.u32 %v202, 4294901760
    %299 = vmatprep.subr.mxu0 %v298
    %v300 = vand.u32 %v201, 4294901760
    %301 = vmatpush1.msra.mxu0 %v300
    %v302 = vand.u32 %v204, 4294901760
    %303 = vmatprep.subr.mxu0 %v302
    %v304 = vand.u32 %v203, 4294901760
    %305 = vmatpush1.msra.mxu0 %v304
    %v306 = vand.u32 %v206, 4294901760
    %307 = vmatprep.subr.mxu0 %v306
    %v308 = vand.u32 %v205, 4294901760
    %309 = vmatpush1.msra.mxu0 %v308
    %v310 = vand.u32 %v208, 4294901760
    %311 = vmatprep.subr.mxu0 %v310
    %v312 = vand.u32 %v207, 4294901760
    %313 = vmatpush1.msra.mxu0 %v312
    %v314 = vand.u32 %v210, 4294901760
    %315 = vmatprep.subr.mxu0 %v314
    %v316 = vand.u32 %v209, 4294901760
    %317 = vmatpush1.msra.mxu0 %v316
    %v318 = vand.u32 %v212, 4294901760
    %319 = vmatprep.subr.mxu0 %v318
    %v320 = vand.u32 %v211, 4294901760
    %321 = vmatpush1.msra.mxu0 %v320
    %v322 = vand.u32 %v214, 4294901760
    %323 = vmatprep.subr.mxu0 %v322
    %v324 = vand.u32 %v213, 4294901760
    %325 = vmatpush1.msra.mxu0 %v324
    %v326 = vand.u32 %v216, 4294901760
    %327 = vmatprep.subr.mxu0 %v326
    %v328 = vand.u32 %v215, 4294901760
    %329 = vmatpush1.msra.mxu0 %v328
    %v330 = vand.u32 %v218, 4294901760
    %331 = vmatprep.subr.mxu0 %v330
    %v332 = vand.u32 %v217, 4294901760
    %333 = vmatpush1.msra.mxu0 %v332
    %v334 = vand.u32 %v220, 4294901760
    %335 = vmatprep.subr.mxu0 %v334
    %v336 = vand.u32 %v219, 4294901760
    %337 = vmatpush1.msra.mxu0 %v336
    %v338 = vand.u32 %v222, 4294901760
    %339 = vmatprep.subr.mxu0 %v338
    %v340 = vand.u32 %v221, 4294901760
    %341 = vmatpush1.msra.mxu0 %v340
    %v342 = vand.u32 %v224, 4294901760
    %343 = vmatprep.subr.mxu0 %v342
    %v344 = vand.u32 %v223, 4294901760
    %345 = vmatpush1.msra.mxu0 %v344
    %v346 = vand.u32 %v226, 4294901760
    %347 = vmatprep.subr.mxu0 %v346
    %v348 = vand.u32 %v225, 4294901760
    %349 = vmatpush1.msra.mxu0 %v348
    %v350 = vand.u32 %v228, 4294901760
    %351 = vmatprep.subr.mxu0 %v350
    %v352 = vand.u32 %v227, 4294901760
    %353 = vmatpush1.msra.mxu0 %v352
    %v354 = vand.u32 %v230, 4294901760
    %355 = vmatprep.subr.mxu0 %v354
    %v356 = vand.u32 %v229, 4294901760
    %357 = vmatpush1.msra.mxu0 %v356
    %v358 = vand.u32 %v232, 4294901760
    %359 = vmatprep.subr.mxu0 %v358
    %v360 = vand.u32 %v231, 4294901760
    %361 = vmatpush1.msra.mxu0 %v360
    %v362 = vand.u32 %v234, 4294901760
    %363 = vmatprep.subr.mxu0 %v362
    %v364 = vand.u32 %v233, 4294901760
    %365 = vmatpush1.msra.mxu0 %v364
    %v366 = vand.u32 %v236, 4294901760
    %367 = vmatprep.subr.mxu0 %v366
    %v368 = vand.u32 %v235, 4294901760
    %369 = vmatpush1.msra.mxu0 %v368
    %v370 = vand.u32 %v238, 4294901760
    %371 = vmatprep.subr.mxu0 %v370
    %v372 = vand.u32 %v237, 4294901760
    %373 = vmatpush1.msra.mxu0 %v372
    %v374 = vand.u32 %v240, 4294901760
    %375 = vmatprep.subr.mxu0 %v374
    %v376 = vand.u32 %v239, 4294901760
    %377 = vmatpush1.msra.mxu0 %v376
    %v378 = vand.u32 %v247, 4294901760
    %v379 = vsub.f32 %v247, %v378
    %v380 = vand.u32 %v379, 4294901760
    %v381 = vsub.f32 %v379, %v380
    %v382 = vand.u32 %v381, 4294901760
    %383 = vmatprep.mubr.f32.mxu0 %v382
    %v384 = vand.u32 %v246, 4294901760
    %v385 = vsub.f32 %v246, %v384
    %v386 = vand.u32 %v385, 4294901760
    %v387 = vsub.f32 %v385, %v386
    %v388 = vand.u32 %v387, 4294901760
    %389 = vmatmul.mubr.f32.gmra.mrb[0].mxu0 %v388
    %v390 = vpop.f32.mrb[0].mxu0
    %v391 = vadd.f32 0.0, %v390
    %v392 = vpop.f32.mrb[0].mxu0
    %v393 = vadd.f32 0.0, %v392
    %394 = vdwg.mxu0
    %v395 = vand.u32 %v178, 4294901760
    %v396 = vsub.f32 %v178, %v395
    %v397 = vand.u32 %v396, 4294901760
    %v398 = vsub.f32 %v396, %v397
    %v399 = vand.u32 %v398, 4294901760
    %400 = vmatprep.subr.mxu0 %v399
    %v401 = vand.u32 %v177, 4294901760
    %v402 = vsub.f32 %v177, %v401
    %v403 = vand.u32 %v402, 4294901760
    %v404 = vsub.f32 %v402, %v403
    %v405 = vand.u32 %v404, 4294901760
    %406 = vmatpush1.msra.mxu0 %v405
    %v407 = vand.u32 %v180, 4294901760
    %v408 = vsub.f32 %v180, %v407
    %v409 = vand.u32 %v408, 4294901760
    %v410 = vsub.f32 %v408, %v409
    %v411 = vand.u32 %v410, 4294901760
    %412 = vmatprep.subr.mxu0 %v411
    %v413 = vand.u32 %v179, 4294901760
    %v414 = vsub.f32 %v179, %v413
    %v415 = vand.u32 %v414, 4294901760
    %v416 = vsub.f32 %v414, %v415
    %v417 = vand.u32 %v416, 4294901760
    %418 = vmatpush1.msra.mxu0 %v417
    %v419 = vand.u32 %v182, 4294901760
    %v420 = vsub.f32 %v182, %v419
    %v421 = vand.u32 %v420, 4294901760
    %v422 = vsub.f32 %v420, %v421
    %v423 = vand.u32 %v422, 4294901760
    %424 = vmatprep.subr.mxu0 %v423
    %v425 = vand.u32 %v181, 4294901760
    %v426 = vsub.f32 %v181, %v425
    %v427 = vand.u32 %v426, 4294901760
    %v428 = vsub.f32 %v426, %v427
    %v429 = vand.u32 %v428, 4294901760
    %430 = vmatpush1.msra.mxu0 %v429
    %v431 = vand.u32 %v184, 4294901760
    %v432 = vsub.f32 %v184, %v431
    %v433 = vand.u32 %v432, 4294901760
    %v434 = vsub.f32 %v432, %v433
    %v435 = vand.u32 %v434, 4294901760
    %436 = vmatprep.subr.mxu0 %v435
    %v437 = vand.u32 %v183, 4294901760
    %v438 = vsub.f32 %v183, %v437
    %v439 = vand.u32 %v438, 4294901760
    %v440 = vsub.f32 %v438, %v439
    %v441 = vand.u32 %v440, 4294901760
    %442 = vmatpush1.msra.mxu0 %v441
    %v443 = vand.u32 %v186, 4294901760
    %v444 = vsub.f32 %v186, %v443
    %v445 = vand.u32 %v444, 4294901760
    %v446 = vsub.f32 %v444, %v445
    %v447 = vand.u32 %v446, 4294901760
    %448 = vmatprep.subr.mxu0 %v447
    %v449 = vand.u32 %v185, 4294901760
    %v450 = vsub.f32 %v185, %v449
    %v451 = vand.u32 %v450, 4294901760
    %v452 = vsub.f32 %v450, %v451
    %v453 = vand.u32 %v452, 4294901760
    %454 = vmatpush1.msra.mxu0 %v453
    %v455 = vand.u32 %v188, 4294901760
    %v456 = vsub.f32 %v188, %v455
    %v457 = vand.u32 %v456, 4294901760
    %v458 = vsub.f32 %v456, %v457
    %v459 = vand.u32 %v458, 4294901760
    %460 = vmatprep.subr.mxu0 %v459
    %v461 = vand.u32 %v187, 4294901760
    %v462 = vsub.f32 %v187, %v461
    %v463 = vand.u32 %v462, 4294901760
    %v464 = vsub.f32 %v462, %v463
    %v465 = vand.u32 %v464, 4294901760
    %466 = vmatpush1.msra.mxu0 %v465
    %v467 = vand.u32 %v190, 4294901760
    %v468 = vsub.f32 %v190, %v467
    %v469 = vand.u32 %v468, 4294901760
    %v470 = vsub.f32 %v468, %v469
    %v471 = vand.u32 %v470, 4294901760
    %472 = vmatprep.subr.mxu0 %v471
    %v473 = vand.u32 %v189, 4294901760
    %v474 = vsub.f32 %v189, %v473
    %v475 = vand.u32 %v474, 4294901760
    %v476 = vsub.f32 %v474, %v475
    %v477 = vand.u32 %v476, 4294901760
    %478 = vmatpush1.msra.mxu0 %v477
    %v479 = vand.u32 %v192, 4294901760
    %v480 = vsub.f32 %v192, %v479
    %v481 = vand.u32 %v480, 4294901760
    %v482 = vsub.f32 %v480, %v481
    %v483 = vand.u32 %v482, 4294901760
    %484 = vmatprep.subr.mxu0 %v483
    %v485 = vand.u32 %v191, 4294901760
    %v486 = vsub.f32 %v191, %v485
    %v487 = vand.u32 %v486, 4294901760
    %v488 = vsub.f32 %v486, %v487
    %v489 = vand.u32 %v488, 4294901760
    %490 = vmatpush1.msra.mxu0 %v489
    %v491 = vand.u32 %v194, 4294901760
    %v492 = vsub.f32 %v194, %v491
    %v493 = vand.u32 %v492, 4294901760
    %v494 = vsub.f32 %v492, %v493
    %v495 = vand.u32 %v494, 4294901760
    %496 = vmatprep.subr.mxu0 %v495
    %v497 = vand.u32 %v193, 4294901760
    %v498 = vsub.f32 %v193, %v497
    %v499 = vand.u32 %v498, 4294901760
    %v500 = vsub.f32 %v498, %v499
    %v501 = vand.u32 %v500, 4294901760
    %502 = vmatpush1.msra.mxu0 %v501
    %v503 = vand.u32 %v196, 4294901760
    %v504 = vsub.f32 %v196, %v503
    %v505 = vand.u32 %v504, 4294901760
    %v506 = vsub.f32 %v504, %v505
    %v507 = vand.u32 %v506, 4294901760
    %508 = vmatprep.subr.mxu0 %v507
    %v509 = vand.u32 %v195, 4294901760
    %v510 = vsub.f32 %v195, %v509
    %v511 = vand.u32 %v510, 4294901760
    %v512 = vsub.f32 %v510, %v511
    %v513 = vand.u32 %v512, 4294901760
    %514 = vmatpush1.msra.mxu0 %v513
    %v515 = vand.u32 %v198, 4294901760
    %v516 = vsub.f32 %v198, %v515
    %v517 = vand.u32 %v516, 4294901760
    %v518 = vsub.f32 %v516, %v517
    %v519 = vand.u32 %v518, 4294901760
    %520 = vmatprep.subr.mxu0 %v519
    %v521 = vand.u32 %v197, 4294901760
    %v522 = vsub.f32 %v197, %v521
    %v523 = vand.u32 %v522, 4294901760
    %v524 = vsub.f32 %v522, %v523
    %v525 = vand.u32 %v524, 4294901760
    %526 = vmatpush1.msra.mxu0 %v525
    %v527 = vand.u32 %v200, 4294901760
    %v528 = vsub.f32 %v200, %v527
    %v529 = vand.u32 %v528, 4294901760
    %v530 = vsub.f32 %v528, %v529
    %v531 = vand.u32 %v530, 4294901760
    %532 = vmatprep.subr.mxu0 %v531
    %v533 = vand.u32 %v199, 4294901760
    %v534 = vsub.f32 %v199, %v533
    %v535 = vand.u32 %v534, 4294901760
    %v536 = vsub.f32 %v534, %v535
    %v537 = vand.u32 %v536, 4294901760
    %538 = vmatpush1.msra.mxu0 %v537
    %v539 = vand.u32 %v202, 4294901760
    %v540 = vsub.f32 %v202, %v539
    %v541 = vand.u32 %v540, 4294901760
    %v542 = vsub.f32 %v540, %v541
    %v543 = vand.u32 %v542, 4294901760
    %544 = vmatprep.subr.mxu0 %v543
    %v545 = vand.u32 %v201, 4294901760
    %v546 = vsub.f32 %v201, %v545
    %v547 = vand.u32 %v546, 4294901760
    %v548 = vsub.f32 %v546, %v547
    %v549 = vand.u32 %v548, 4294901760
    %550 = vmatpush1.msra.mxu0 %v549
    %v551 = vand.u32 %v204, 4294901760
    %v552 = vsub.f32 %v204, %v551
    %v553 = vand.u32 %v552, 4294901760
    %v554 = vsub.f32 %v552, %v553
    %v555 = vand.u32 %v554, 4294901760
    %556 = vmatprep.subr.mxu0 %v555
    %v557 = vand.u32 %v203, 4294901760
    %v558 = vsub.f32 %v203, %v557
    %v559 = vand.u32 %v558, 4294901760
    %v560 = vsub.f32 %v558, %v559
    %v561 = vand.u32 %v560, 4294901760
    %562 = vmatpush1.msra.mxu0 %v561
    %v563 = vand.u32 %v206, 4294901760
    %v564 = vsub.f32 %v206, %v563
    %v565 = vand.u32 %v564, 4294901760
    %v566 = vsub.f32 %v564, %v565
    %v567 = vand.u32 %v566, 4294901760
    %568 = vmatprep.subr.mxu0 %v567
    %v569 = vand.u32 %v205, 4294901760
    %v570 = vsub.f32 %v205, %v569
    %v571 = vand.u32 %v570, 4294901760
    %v572 = vsub.f32 %v570, %v571
    %v573 = vand.u32 %v572, 4294901760
    %574 = vmatpush1.msra.mxu0 %v573
    %v575 = vand.u32 %v208, 4294901760
    %v576 = vsub.f32 %v208, %v575
    %v577 = vand.u32 %v576, 4294901760
    %v578 = vsub.f32 %v576, %v577
    %v579 = vand.u32 %v578, 4294901760
    %580 = vmatprep.subr.mxu0 %v579
    %v581 = vand.u32 %v207, 4294901760
    %v582 = vsub.f32 %v207, %v581
    %v583 = vand.u32 %v582, 4294901760
    %v584 = vsub.f32 %v582, %v583
    %v585 = vand.u32 %v584, 4294901760
    %586 = vmatpush1.msra.mxu0 %v585
    %v587 = vand.u32 %v210, 4294901760
    %v588 = vsub.f32 %v210, %v587
    %v589 = vand.u32 %v588, 4294901760
    %v590 = vsub.f32 %v588, %v589
    %v591 = vand.u32 %v590, 4294901760
    %592 = vmatprep.subr.mxu0 %v591
    %v593 = vand.u32 %v209, 4294901760
    %v594 = vsub.f32 %v209, %v593
    %v595 = vand.u32 %v594, 4294901760
    %v596 = vsub.f32 %v594, %v595
    %v597 = vand.u32 %v596, 4294901760
    %598 = vmatpush1.msra.mxu0 %v597
    %v599 = vand.u32 %v212, 4294901760
    %v600 = vsub.f32 %v212, %v599
    %v601 = vand.u32 %v600, 4294901760
    %v602 = vsub.f32 %v600, %v601
    %v603 = vand.u32 %v602, 4294901760
    %604 = vmatprep.subr.mxu0 %v603
    %v605 = vand.u32 %v211, 4294901760
    %v606 = vsub.f32 %v211, %v605
    %v607 = vand.u32 %v606, 4294901760
    %v608 = vsub.f32 %v606, %v607
    %v609 = vand.u32 %v608, 4294901760
    %610 = vmatpush1.msra.mxu0 %v609
    %v611 = vand.u32 %v214, 4294901760
    %v612 = vsub.f32 %v214, %v611
    %v613 = vand.u32 %v612, 4294901760
    %v614 = vsub.f32 %v612, %v613
    %v615 = vand.u32 %v614, 4294901760
    %616 = vmatprep.subr.mxu0 %v615
    %v617 = vand.u32 %v213, 4294901760
    %v618 = vsub.f32 %v213, %v617
    %v619 = vand.u32 %v618, 4294901760
    %v620 = vsub.f32 %v618, %v619
    %v621 = vand.u32 %v620, 4294901760
    %622 = vmatpush1.msra.mxu0 %v621
    %v623 = vand.u32 %v216, 4294901760
    %v624 = vsub.f32 %v216, %v623
    %v625 = vand.u32 %v624, 4294901760
    %v626 = vsub.f32 %v624, %v625
    %v627 = vand.u32 %v626, 4294901760
    %628 = vmatprep.subr.mxu0 %v627
    %v629 = vand.u32 %v215, 4294901760
    %v630 = vsub.f32 %v215, %v629
    %v631 = vand.u32 %v630, 4294901760
    %v632 = vsub.f32 %v630, %v631
    %v633 = vand.u32 %v632, 4294901760
    %634 = vmatpush1.msra.mxu0 %v633
    %v635 = vand.u32 %v218, 4294901760
    %v636 = vsub.f32 %v218, %v635
    %v637 = vand.u32 %v636, 4294901760
    %v638 = vsub.f32 %v636, %v637
    %v639 = vand.u32 %v638, 4294901760
    %640 = vmatprep.subr.mxu0 %v639
    %v641 = vand.u32 %v217, 4294901760
    %v642 = vsub.f32 %v217, %v641
    %v643 = vand.u32 %v642, 4294901760
    %v644 = vsub.f32 %v642, %v643
    %v645 = vand.u32 %v644, 4294901760
    %646 = vmatpush1.msra.mxu0 %v645
    %v647 = vand.u32 %v220, 4294901760
    %v648 = vsub.f32 %v220, %v647
    %v649 = vand.u32 %v648, 4294901760
    %v650 = vsub.f32 %v648, %v649
    %v651 = vand.u32 %v650, 4294901760
    %652 = vmatprep.subr.mxu0 %v651
    %v653 = vand.u32 %v219, 4294901760
    %v654 = vsub.f32 %v219, %v653
    %v655 = vand.u32 %v654, 4294901760
    %v656 = vsub.f32 %v654, %v655
    %v657 = vand.u32 %v656, 4294901760
    %658 = vmatpush1.msra.mxu0 %v657
    %v659 = vand.u32 %v222, 4294901760
    %v660 = vsub.f32 %v222, %v659
    %v661 = vand.u32 %v660, 4294901760
    %v662 = vsub.f32 %v660, %v661
    %v663 = vand.u32 %v662, 4294901760
    %664 = vmatprep.subr.mxu0 %v663
    %v665 = vand.u32 %v221, 4294901760
    %v666 = vsub.f32 %v221, %v665
    %v667 = vand.u32 %v666, 4294901760
    %v668 = vsub.f32 %v666, %v667
    %v669 = vand.u32 %v668, 4294901760
    %670 = vmatpush1.msra.mxu0 %v669
    %v671 = vand.u32 %v224, 4294901760
    %v672 = vsub.f32 %v224, %v671
    %v673 = vand.u32 %v672, 4294901760
    %v674 = vsub.f32 %v672, %v673
    %v675 = vand.u32 %v674, 4294901760
    %676 = vmatprep.subr.mxu0 %v675
    %v677 = vand.u32 %v223, 4294901760
    %v678 = vsub.f32 %v223, %v677
    %v679 = vand.u32 %v678, 4294901760
    %v680 = vsub.f32 %v678, %v679
    %v681 = vand.u32 %v680, 4294901760
    %682 = vmatpush1.msra.mxu0 %v681
    %v683 = vand.u32 %v226, 4294901760
    %v684 = vsub.f32 %v226, %v683
    %v685 = vand.u32 %v684, 4294901760
    %v686 = vsub.f32 %v684, %v685
    %v687 = vand.u32 %v686, 4294901760
    %688 = vmatprep.subr.mxu0 %v687
    %v689 = vand.u32 %v225, 4294901760
    %v690 = vsub.f32 %v225, %v689
    %v691 = vand.u32 %v690, 4294901760
    %v692 = vsub.f32 %v690, %v691
    %v693 = vand.u32 %v692, 4294901760
    %694 = vmatpush1.msra.mxu0 %v693
    %v695 = vand.u32 %v228, 4294901760
    %v696 = vsub.f32 %v228, %v695
    %v697 = vand.u32 %v696, 4294901760
    %v698 = vsub.f32 %v696, %v697
    %v699 = vand.u32 %v698, 4294901760
    %700 = vmatprep.subr.mxu0 %v699
    %v701 = vand.u32 %v227, 4294901760
    %v702 = vsub.f32 %v227, %v701
    %v703 = vand.u32 %v702, 4294901760
    %v704 = vsub.f32 %v702, %v703
    %v705 = vand.u32 %v704, 4294901760
    %706 = vmatpush1.msra.mxu0 %v705
    %v707 = vand.u32 %v230, 4294901760
    %v708 = vsub.f32 %v230, %v707
    %v709 = vand.u32 %v708, 4294901760
    %v710 = vsub.f32 %v708, %v709
    %v711 = vand.u32 %v710, 4294901760
    %712 = vmatprep.subr.mxu0 %v711
    %v713 = vand.u32 %v229, 4294901760
    %v714 = vsub.f32 %v229, %v713
    %v715 = vand.u32 %v714, 4294901760
    %v716 = vsub.f32 %v714, %v715
    %v717 = vand.u32 %v716, 4294901760
    %718 = vmatpush1.msra.mxu0 %v717
    %v719 = vand.u32 %v232, 4294901760
    %v720 = vsub.f32 %v232, %v719
    %v721 = vand.u32 %v720, 4294901760
    %v722 = vsub.f32 %v720, %v721
    %v723 = vand.u32 %v722, 4294901760
    %724 = vmatprep.subr.mxu0 %v723
    %v725 = vand.u32 %v231, 4294901760
    %v726 = vsub.f32 %v231, %v725
    %v727 = vand.u32 %v726, 4294901760
    %v728 = vsub.f32 %v726, %v727
    %v729 = vand.u32 %v728, 4294901760
    %730 = vmatpush1.msra.mxu0 %v729
    %v731 = vand.u32 %v234, 4294901760
    %v732 = vsub.f32 %v234, %v731
    %v733 = vand.u32 %v732, 4294901760
    %v734 = vsub.f32 %v732, %v733
    %v735 = vand.u32 %v734, 4294901760
    %736 = vmatprep.subr.mxu0 %v735
    %v737 = vand.u32 %v233, 4294901760
    %v738 = vsub.f32 %v233, %v737
    %v739 = vand.u32 %v738, 4294901760
    %v740 = vsub.f32 %v738, %v739
    %v741 = vand.u32 %v740, 4294901760
    %742 = vmatpush1.msra.mxu0 %v741
    %v743 = vand.u32 %v236, 4294901760
    %v744 = vsub.f32 %v236, %v743
    %v745 = vand.u32 %v744, 4294901760
    %v746 = vsub.f32 %v744, %v745
    %v747 = vand.u32 %v746, 4294901760
    %748 = vmatprep.subr.mxu0 %v747
    %v749 = vand.u32 %v235, 4294901760
    %v750 = vsub.f32 %v235, %v749
    %v751 = vand.u32 %v750, 4294901760
    %v752 = vsub.f32 %v750, %v751
    %v753 = vand.u32 %v752, 4294901760
    %754 = vmatpush1.msra.mxu0 %v753
    %v755 = vand.u32 %v238, 4294901760
    %v756 = vsub.f32 %v238, %v755
    %v757 = vand.u32 %v756, 4294901760
    %v758 = vsub.f32 %v756, %v757
    %v759 = vand.u32 %v758, 4294901760
    %760 = vmatprep.subr.mxu0 %v759
    %v761 = vand.u32 %v237, 4294901760
    %v762 = vsub.f32 %v237, %v761
    %v763 = vand.u32 %v762, 4294901760
    %v764 = vsub.f32 %v762, %v763
    %v765 = vand.u32 %v764, 4294901760
    %766 = vmatpush1.msra.mxu0 %v765
    %v767 = vand.u32 %v240, 4294901760
    %v768 = vsub.f32 %v240, %v767
    %v769 = vand.u32 %v768, 4294901760
    %v770 = vsub.f32 %v768, %v769
    %v771 = vand.u32 %v770, 4294901760
    %772 = vmatprep.subr.mxu0 %v771
    %v773 = vand.u32 %v239, 4294901760
    %v774 = vsub.f32 %v239, %v773
    %v775 = vand.u32 %v774, 4294901760
    %v776 = vsub.f32 %v774, %v775
    %v777 = vand.u32 %v776, 4294901760
    %778 = vmatpush1.msra.mxu0 %v777
    %v779 = vand.u32 %v247, 4294901760
    %780 = vmatprep.mubr.f32.mxu0 %v779
    %v781 = vand.u32 %v246, 4294901760
    %782 = vmatmul.mubr.f32.gmra.mrb[0].mxu0 %v781
    %v783 = vpop.f32.mrb[0].mxu0
    %v784 = vadd.f32 %v391, %v783
    %v785 = vpop.f32.mrb[0].mxu0
    %v786 = vadd.f32 %v393, %v785
    %787 = vdwg.mxu0
    %v788 = vand.u32 %v178, 4294901760
    %v789 = vsub.f32 %v178, %v788
    %790 = vmatprep.subr.mxu0 %v789
    %v791 = vand.u32 %v177, 4294901760
    %v792 = vsub.f32 %v177, %v791
    %793 = vmatpush1.msra.mxu0 %v792
    %v794 = vand.u32 %v180, 4294901760
    %v795 = vsub.f32 %v180, %v794
    %796 = vmatprep.subr.mxu0 %v795
    %v797 = vand.u32 %v179, 4294901760
    %v798 = vsub.f32 %v179, %v797
    %799 = vmatpush1.msra.mxu0 %v798
    %v800 = vand.u32 %v182, 4294901760
    %v801 = vsub.f32 %v182, %v800
    %802 = vmatprep.subr.mxu0 %v801
    %v803 = vand.u32 %v181, 4294901760
    %v804 = vsub.f32 %v181, %v803
    %805 = vmatpush1.msra.mxu0 %v804
    %v806 = vand.u32 %v184, 4294901760
    %v807 = vsub.f32 %v184, %v806
    %808 = vmatprep.subr.mxu0 %v807
    %v809 = vand.u32 %v183, 4294901760
    %v810 = vsub.f32 %v183, %v809
    %811 = vmatpush1.msra.mxu0 %v810
    %v812 = vand.u32 %v186, 4294901760
    %v813 = vsub.f32 %v186, %v812
    %814 = vmatprep.subr.mxu0 %v813
    %v815 = vand.u32 %v185, 4294901760
    %v816 = vsub.f32 %v185, %v815
    %817 = vmatpush1.msra.mxu0 %v816
    %v818 = vand.u32 %v188, 4294901760
    %v819 = vsub.f32 %v188, %v818
    %820 = vmatprep.subr.mxu0 %v819
    %v821 = vand.u32 %v187, 4294901760
    %v822 = vsub.f32 %v187, %v821
    %823 = vmatpush1.msra.mxu0 %v822
    %v824 = vand.u32 %v190, 4294901760
    %v825 = vsub.f32 %v190, %v824
    %826 = vmatprep.subr.mxu0 %v825
    %v827 = vand.u32 %v189, 4294901760
    %v828 = vsub.f32 %v189, %v827
    %829 = vmatpush1.msra.mxu0 %v828
    %v830 = vand.u32 %v192, 4294901760
    %v831 = vsub.f32 %v192, %v830
    %832 = vmatprep.subr.mxu0 %v831
    %v833 = vand.u32 %v191, 4294901760
    %v834 = vsub.f32 %v191, %v833
    %835 = vmatpush1.msra.mxu0 %v834
    %v836 = vand.u32 %v194, 4294901760
    %v837 = vsub.f32 %v194, %v836
    %838 = vmatprep.subr.mxu0 %v837
    %v839 = vand.u32 %v193, 4294901760
    %v840 = vsub.f32 %v193, %v839
    %841 = vmatpush1.msra.mxu0 %v840
    %v842 = vand.u32 %v196, 4294901760
    %v843 = vsub.f32 %v196, %v842
    %844 = vmatprep.subr.mxu0 %v843
    %v845 = vand.u32 %v195, 4294901760
    %v846 = vsub.f32 %v195, %v845
    %847 = vmatpush1.msra.mxu0 %v846
    %v848 = vand.u32 %v198, 4294901760
    %v849 = vsub.f32 %v198, %v848
    %850 = vmatprep.subr.mxu0 %v849
    %v851 = vand.u32 %v197, 4294901760
    %v852 = vsub.f32 %v197, %v851
    %853 = vmatpush1.msra.mxu0 %v852
    %v854 = vand.u32 %v200, 4294901760
    %v855 = vsub.f32 %v200, %v854
    %856 = vmatprep.subr.mxu0 %v855
    %v857 = vand.u32 %v199, 4294901760
    %v858 = vsub.f32 %v199, %v857
    %859 = vmatpush1.msra.mxu0 %v858
    %v860 = vand.u32 %v202, 4294901760
    %v861 = vsub.f32 %v202, %v860
    %862 = vmatprep.subr.mxu0 %v861
    %v863 = vand.u32 %v201, 4294901760
    %v864 = vsub.f32 %v201, %v863
    %865 = vmatpush1.msra.mxu0 %v864
    %v866 = vand.u32 %v204, 4294901760
    %v867 = vsub.f32 %v204, %v866
    %868 = vmatprep.subr.mxu0 %v867
    %v869 = vand.u32 %v203, 4294901760
    %v870 = vsub.f32 %v203, %v869
    %871 = vmatpush1.msra.mxu0 %v870
    %v872 = vand.u32 %v206, 4294901760
    %v873 = vsub.f32 %v206, %v872
    %874 = vmatprep.subr.mxu0 %v873
    %v875 = vand.u32 %v205, 4294901760
    %v876 = vsub.f32 %v205, %v875
    %877 = vmatpush1.msra.mxu0 %v876
    %v878 = vand.u32 %v208, 4294901760
    %v879 = vsub.f32 %v208, %v878
    %880 = vmatprep.subr.mxu0 %v879
    %v881 = vand.u32 %v207, 4294901760
    %v882 = vsub.f32 %v207, %v881
    %883 = vmatpush1.msra.mxu0 %v882
    %v884 = vand.u32 %v210, 4294901760
    %v885 = vsub.f32 %v210, %v884
    %886 = vmatprep.subr.mxu0 %v885
    %v887 = vand.u32 %v209, 4294901760
    %v888 = vsub.f32 %v209, %v887
    %889 = vmatpush1.msra.mxu0 %v888
    %v890 = vand.u32 %v212, 4294901760
    %v891 = vsub.f32 %v212, %v890
    %892 = vmatprep.subr.mxu0 %v891
    %v893 = vand.u32 %v211, 4294901760
    %v894 = vsub.f32 %v211, %v893
    %895 = vmatpush1.msra.mxu0 %v894
    %v896 = vand.u32 %v214, 4294901760
    %v897 = vsub.f32 %v214, %v896
    %898 = vmatprep.subr.mxu0 %v897
    %v899 = vand.u32 %v213, 4294901760
    %v900 = vsub.f32 %v213, %v899
    %901 = vmatpush1.msra.mxu0 %v900
    %v902 = vand.u32 %v216, 4294901760
    %v903 = vsub.f32 %v216, %v902
    %904 = vmatprep.subr.mxu0 %v903
    %v905 = vand.u32 %v215, 4294901760
    %v906 = vsub.f32 %v215, %v905
    %907 = vmatpush1.msra.mxu0 %v906
    %v908 = vand.u32 %v218, 4294901760
    %v909 = vsub.f32 %v218, %v908
    %910 = vmatprep.subr.mxu0 %v909
    %v911 = vand.u32 %v217, 4294901760
    %v912 = vsub.f32 %v217, %v911
    %913 = vmatpush1.msra.mxu0 %v912
    %v914 = vand.u32 %v220, 4294901760
    %v915 = vsub.f32 %v220, %v914
    %916 = vmatprep.subr.mxu0 %v915
    %v917 = vand.u32 %v219, 4294901760
    %v918 = vsub.f32 %v219, %v917
    %919 = vmatpush1.msra.mxu0 %v918
    %v920 = vand.u32 %v222, 4294901760
    %v921 = vsub.f32 %v222, %v920
    %922 = vmatprep.subr.mxu0 %v921
    %v923 = vand.u32 %v221, 4294901760
    %v924 = vsub.f32 %v221, %v923
    %925 = vmatpush1.msra.mxu0 %v924
    %v926 = vand.u32 %v224, 4294901760
    %v927 = vsub.f32 %v224, %v926
    %928 = vmatprep.subr.mxu0 %v927
    %v929 = vand.u32 %v223, 4294901760
    %v930 = vsub.f32 %v223, %v929
    %931 = vmatpush1.msra.mxu0 %v930
    %v932 = vand.u32 %v226, 4294901760
    %v933 = vsub.f32 %v226, %v932
    %934 = vmatprep.subr.mxu0 %v933
    %v935 = vand.u32 %v225, 4294901760
    %v936 = vsub.f32 %v225, %v935
    %937 = vmatpush1.msra.mxu0 %v936
    %v938 = vand.u32 %v228, 4294901760
    %v939 = vsub.f32 %v228, %v938
    %940 = vmatprep.subr.mxu0 %v939
    %v941 = vand.u32 %v227, 4294901760
    %v942 = vsub.f32 %v227, %v941
    %943 = vmatpush1.msra.mxu0 %v942
    %v944 = vand.u32 %v230, 4294901760
    %v945 = vsub.f32 %v230, %v944
    %946 = vmatprep.subr.mxu0 %v945
    %v947 = vand.u32 %v229, 4294901760
    %v948 = vsub.f32 %v229, %v947
    %949 = vmatpush1.msra.mxu0 %v948
    %v950 = vand.u32 %v232, 4294901760
    %v951 = vsub.f32 %v232, %v950
    %952 = vmatprep.subr.mxu0 %v951
    %v953 = vand.u32 %v231, 4294901760
    %v954 = vsub.f32 %v231, %v953
    %955 = vmatpush1.msra.mxu0 %v954
    %v956 = vand.u32 %v234, 4294901760
    %v957 = vsub.f32 %v234, %v956
    %958 = vmatprep.subr.mxu0 %v957
    %v959 = vand.u32 %v233, 4294901760
    %v960 = vsub.f32 %v233, %v959
    %961 = vmatpush1.msra.mxu0 %v960
    %v962 = vand.u32 %v236, 4294901760
    %v963 = vsub.f32 %v236, %v962
    %964 = vmatprep.subr.mxu0 %v963
    %v965 = vand.u32 %v235, 4294901760
    %v966 = vsub.f32 %v235, %v965
    %967 = vmatpush1.msra.mxu0 %v966
    %v968 = vand.u32 %v238, 4294901760
    %v969 = vsub.f32 %v238, %v968
    %970 = vmatprep.subr.mxu0 %v969
    %v971 = vand.u32 %v237, 4294901760
    %v972 = vsub.f32 %v237, %v971
    %973 = vmatpush1.msra.mxu0 %v972
    %v974 = vand.u32 %v240, 4294901760
    %v975 = vsub.f32 %v240, %v974
    %976 = vmatprep.subr.mxu0 %v975
    %v977 = vand.u32 %v239, 4294901760
    %v978 = vsub.f32 %v239, %v977
    %979 = vmatpush1.msra.mxu0 %v978
    %v980 = vand.u32 %v247, 4294901760
    %v981 = vsub.f32 %v247, %v980
    %982 = vmatprep.mubr.f32.mxu0 %v981
    %v983 = vand.u32 %v246, 4294901760
    %v984 = vsub.f32 %v246, %v983
    %985 = vmatmul.mubr.f32.gmra.mrb[0].mxu0 %v984
    %v986 = vpop.f32.mrb[0].mxu0
    %v987 = vadd.f32 %v784, %v986
    %v988 = vpop.f32.mrb[0].mxu0
    %v989 = vadd.f32 %v786, %v988
    %990 = vdwg.mxu0
    %v991 = vand.u32 %v178, 4294901760
    %992 = vmatprep.subr.mxu0 %v991
    %v993 = vand.u32 %v177, 4294901760
    %994 = vmatpush1.msra.mxu0 %v993
    %v995 = vand.u32 %v180, 4294901760
    %996 = vmatprep.subr.mxu0 %v995
    %v997 = vand.u32 %v179, 4294901760
    %998 = vmatpush1.msra.mxu0 %v997
    %v999 = vand.u32 %v182, 4294901760
    %1000 = vmatprep.subr.mxu0 %v999
    %v1001 = vand.u32 %v181, 4294901760
    %1002 = vmatpush1.msra.mxu0 %v1001
    %v1003 = vand.u32 %v184, 4294901760
    %1004 = vmatprep.subr.mxu0 %v1003
    %v1005 = vand.u32 %v183, 4294901760
    %1006 = vmatpush1.msra.mxu0 %v1005
    %v1007 = vand.u32 %v186, 4294901760
    %1008 = vmatprep.subr.mxu0 %v1007
    %v1009 = vand.u32 %v185, 4294901760
    %1010 = vmatpush1.msra.mxu0 %v1009
    %v1011 = vand.u32 %v188, 4294901760
    %1012 = vmatprep.subr.mxu0 %v1011
    %v1013 = vand.u32 %v187, 4294901760
    %1014 = vmatpush1.msra.mxu0 %v1013
    %v1015 = vand.u32 %v190, 4294901760
    %1016 = vmatprep.subr.mxu0 %v1015
    %v1017 = vand.u32 %v189, 4294901760
    %1018 = vmatpush1.msra.mxu0 %v1017
    %v1019 = vand.u32 %v192, 4294901760
    %1020 = vmatprep.subr.mxu0 %v1019
    %v1021 = vand.u32 %v191, 4294901760
    %1022 = vmatpush1.msra.mxu0 %v1021
    %v1023 = vand.u32 %v194, 4294901760
    %1024 = vmatprep.subr.mxu0 %v1023
    %v1025 = vand.u32 %v193, 4294901760
    %1026 = vmatpush1.msra.mxu0 %v1025
    %v1027 = vand.u32 %v196, 4294901760
    %1028 = vmatprep.subr.mxu0 %v1027
    %v1029 = vand.u32 %v195, 4294901760
    %1030 = vmatpush1.msra.mxu0 %v1029
    %v1031 = vand.u32 %v198, 4294901760
    %1032 = vmatprep.subr.mxu0 %v1031
    %v1033 = vand.u32 %v197, 4294901760
    %1034 = vmatpush1.msra.mxu0 %v1033
    %v1035 = vand.u32 %v200, 4294901760
    %1036 = vmatprep.subr.mxu0 %v1035
    %v1037 = vand.u32 %v199, 4294901760
    %1038 = vmatpush1.msra.mxu0 %v1037
    %v1039 = vand.u32 %v202, 4294901760
    %1040 = vmatprep.subr.mxu0 %v1039
    %v1041 = vand.u32 %v201, 4294901760
    %1042 = vmatpush1.msra.mxu0 %v1041
    %v1043 = vand.u32 %v204, 4294901760
    %1044 = vmatprep.subr.mxu0 %v1043
    %v1045 = vand.u32 %v203, 4294901760
    %1046 = vmatpush1.msra.mxu0 %v1045
    %v1047 = vand.u32 %v206, 4294901760
    %1048 = vmatprep.subr.mxu0 %v1047
    %v1049 = vand.u32 %v205, 4294901760
    %1050 = vmatpush1.msra.mxu0 %v1049
    %v1051 = vand.u32 %v208, 4294901760
    %1052 = vmatprep.subr.mxu0 %v1051
    %v1053 = vand.u32 %v207, 4294901760
    %1054 = vmatpush1.msra.mxu0 %v1053
    %v1055 = vand.u32 %v210, 4294901760
    %1056 = vmatprep.subr.mxu0 %v1055
    %v1057 = vand.u32 %v209, 4294901760
    %1058 = vmatpush1.msra.mxu0 %v1057
    %v1059 = vand.u32 %v212, 4294901760
    %1060 = vmatprep.subr.mxu0 %v1059
    %v1061 = vand.u32 %v211, 4294901760
    %1062 = vmatpush1.msra.mxu0 %v1061
    %v1063 = vand.u32 %v214, 4294901760
    %1064 = vmatprep.subr.mxu0 %v1063
    %v1065 = vand.u32 %v213, 4294901760
    %1066 = vmatpush1.msra.mxu0 %v1065
    %v1067 = vand.u32 %v216, 4294901760
    %1068 = vmatprep.subr.mxu0 %v1067
    %v1069 = vand.u32 %v215, 4294901760
    %1070 = vmatpush1.msra.mxu0 %v1069
    %v1071 = vand.u32 %v218, 4294901760
    %1072 = vmatprep.subr.mxu0 %v1071
    %v1073 = vand.u32 %v217, 4294901760
    %1074 = vmatpush1.msra.mxu0 %v1073
    %v1075 = vand.u32 %v220, 4294901760
    %1076 = vmatprep.subr.mxu0 %v1075
    %v1077 = vand.u32 %v219, 4294901760
    %1078 = vmatpush1.msra.mxu0 %v1077
    %v1079 = vand.u32 %v222, 4294901760
    %1080 = vmatprep.subr.mxu0 %v1079
    %v1081 = vand.u32 %v221, 4294901760
    %1082 = vmatpush1.msra.mxu0 %v1081
    %v1083 = vand.u32 %v224, 4294901760
    %1084 = vmatprep.subr.mxu0 %v1083
    %v1085 = vand.u32 %v223, 4294901760
    %1086 = vmatpush1.msra.mxu0 %v1085
    %v1087 = vand.u32 %v226, 4294901760
    %1088 = vmatprep.subr.mxu0 %v1087
    %v1089 = vand.u32 %v225, 4294901760
    %1090 = vmatpush1.msra.mxu0 %v1089
    %v1091 = vand.u32 %v228, 4294901760
    %1092 = vmatprep.subr.mxu0 %v1091
    %v1093 = vand.u32 %v227, 4294901760
    %1094 = vmatpush1.msra.mxu0 %v1093
    %v1095 = vand.u32 %v230, 4294901760
    %1096 = vmatprep.subr.mxu0 %v1095
    %v1097 = vand.u32 %v229, 4294901760
    %1098 = vmatpush1.msra.mxu0 %v1097
    %v1099 = vand.u32 %v232, 4294901760
    %1100 = vmatprep.subr.mxu0 %v1099
    %v1101 = vand.u32 %v231, 4294901760
    %1102 = vmatpush1.msra.mxu0 %v1101
    %v1103 = vand.u32 %v234, 4294901760
    %1104 = vmatprep.subr.mxu0 %v1103
    %v1105 = vand.u32 %v233, 4294901760
    %1106 = vmatpush1.msra.mxu0 %v1105
    %v1107 = vand.u32 %v236, 4294901760
    %1108 = vmatprep.subr.mxu0 %v1107
    %v1109 = vand.u32 %v235, 4294901760
    %1110 = vmatpush1.msra.mxu0 %v1109
    %v1111 = vand.u32 %v238, 4294901760
    %1112 = vmatprep.subr.mxu0 %v1111
    %v1113 = vand.u32 %v237, 4294901760
    %1114 = vmatpush1.msra.mxu0 %v1113
    %v1115 = vand.u32 %v240, 4294901760
    %1116 = vmatprep.subr.mxu0 %v1115
    %v1117 = vand.u32 %v239, 4294901760
    %1118 = vmatpush1.msra.mxu0 %v1117
    %v1119 = vand.u32 %v247, 4294901760
    %v1120 = vsub.f32 %v247, %v1119
    %v1121 = vand.u32 %v1120, 4294901760
    %1122 = vmatprep.mubr.f32.mxu0 %v1121
    %v1123 = vand.u32 %v246, 4294901760
    %v1124 = vsub.f32 %v246, %v1123
    %v1125 = vand.u32 %v1124, 4294901760
    %1126 = vmatmul.mubr.f32.gmra.mrb[0].mxu0 %v1125
    %v1127 = vpop.f32.mrb[0].mxu0
    %v1128 = vadd.f32 %v987, %v1127
    %v1129 = vpop.f32.mrb[0].mxu0
    %v1130 = vadd.f32 %v989, %v1129
    %1131 = vdwg.mxu0
    %v1132 = vand.u32 %v178, 4294901760
    %v1133 = vsub.f32 %v178, %v1132
    %v1134 = vand.u32 %v1133, 4294901760
    %1135 = vmatprep.subr.mxu0 %v1134
    %v1136 = vand.u32 %v177, 4294901760
    %v1137 = vsub.f32 %v177, %v1136
    %v1138 = vand.u32 %v1137, 4294901760
    %1139 = vmatpush1.msra.mxu0 %v1138
    %v1140 = vand.u32 %v180, 4294901760
    %v1141 = vsub.f32 %v180, %v1140
    %v1142 = vand.u32 %v1141, 4294901760
    %1143 = vmatprep.subr.mxu0 %v1142
    %v1144 = vand.u32 %v179, 4294901760
    %v1145 = vsub.f32 %v179, %v1144
    %v1146 = vand.u32 %v1145, 4294901760
    %1147 = vmatpush1.msra.mxu0 %v1146
    %v1148 = vand.u32 %v182, 4294901760
    %v1149 = vsub.f32 %v182, %v1148
    %v1150 = vand.u32 %v1149, 4294901760
    %1151 = vmatprep.subr.mxu0 %v1150
    %v1152 = vand.u32 %v181, 4294901760
    %v1153 = vsub.f32 %v181, %v1152
    %v1154 = vand.u32 %v1153, 4294901760
    %1155 = vmatpush1.msra.mxu0 %v1154
    %v1156 = vand.u32 %v184, 4294901760
    %v1157 = vsub.f32 %v184, %v1156
    %v1158 = vand.u32 %v1157, 4294901760
    %1159 = vmatprep.subr.mxu0 %v1158
    %v1160 = vand.u32 %v183, 4294901760
    %v1161 = vsub.f32 %v183, %v1160
    %v1162 = vand.u32 %v1161, 4294901760
    %1163 = vmatpush1.msra.mxu0 %v1162
    %v1164 = vand.u32 %v186, 4294901760
    %v1165 = vsub.f32 %v186, %v1164
    %v1166 = vand.u32 %v1165, 4294901760
    %1167 = vmatprep.subr.mxu0 %v1166
    %v1168 = vand.u32 %v185, 4294901760
    %v1169 = vsub.f32 %v185, %v1168
    %v1170 = vand.u32 %v1169, 4294901760
    %1171 = vmatpush1.msra.mxu0 %v1170
    %v1172 = vand.u32 %v188, 4294901760
    %v1173 = vsub.f32 %v188, %v1172
    %v1174 = vand.u32 %v1173, 4294901760
    %1175 = vmatprep.subr.mxu0 %v1174
    %v1176 = vand.u32 %v187, 4294901760
    %v1177 = vsub.f32 %v187, %v1176
    %v1178 = vand.u32 %v1177, 4294901760
    %1179 = vmatpush1.msra.mxu0 %v1178
    %v1180 = vand.u32 %v190, 4294901760
    %v1181 = vsub.f32 %v190, %v1180
    %v1182 = vand.u32 %v1181, 4294901760
    %1183 = vmatprep.subr.mxu0 %v1182
    %v1184 = vand.u32 %v189, 4294901760
    %v1185 = vsub.f32 %v189, %v1184
    %v1186 = vand.u32 %v1185, 4294901760
    %1187 = vmatpush1.msra.mxu0 %v1186
    %v1188 = vand.u32 %v192, 4294901760
    %v1189 = vsub.f32 %v192, %v1188
    %v1190 = vand.u32 %v1189, 4294901760
    %1191 = vmatprep.subr.mxu0 %v1190
    %v1192 = vand.u32 %v191, 4294901760
    %v1193 = vsub.f32 %v191, %v1192
    %v1194 = vand.u32 %v1193, 4294901760
    %1195 = vmatpush1.msra.mxu0 %v1194
    %v1196 = vand.u32 %v194, 4294901760
    %v1197 = vsub.f32 %v194, %v1196
    %v1198 = vand.u32 %v1197, 4294901760
    %1199 = vmatprep.subr.mxu0 %v1198
    %v1200 = vand.u32 %v193, 4294901760
    %v1201 = vsub.f32 %v193, %v1200
    %v1202 = vand.u32 %v1201, 4294901760
    %1203 = vmatpush1.msra.mxu0 %v1202
    %v1204 = vand.u32 %v196, 4294901760
    %v1205 = vsub.f32 %v196, %v1204
    %v1206 = vand.u32 %v1205, 4294901760
    %1207 = vmatprep.subr.mxu0 %v1206
    %v1208 = vand.u32 %v195, 4294901760
    %v1209 = vsub.f32 %v195, %v1208
    %v1210 = vand.u32 %v1209, 4294901760
    %1211 = vmatpush1.msra.mxu0 %v1210
    %v1212 = vand.u32 %v198, 4294901760
    %v1213 = vsub.f32 %v198, %v1212
    %v1214 = vand.u32 %v1213, 4294901760
    %1215 = vmatprep.subr.mxu0 %v1214
    %v1216 = vand.u32 %v197, 4294901760
    %v1217 = vsub.f32 %v197, %v1216
    %v1218 = vand.u32 %v1217, 4294901760
    %1219 = vmatpush1.msra.mxu0 %v1218
    %v1220 = vand.u32 %v200, 4294901760
    %v1221 = vsub.f32 %v200, %v1220
    %v1222 = vand.u32 %v1221, 4294901760
    %1223 = vmatprep.subr.mxu0 %v1222
    %v1224 = vand.u32 %v199, 4294901760
    %v1225 = vsub.f32 %v199, %v1224
    %v1226 = vand.u32 %v1225, 4294901760
    %1227 = vmatpush1.msra.mxu0 %v1226
    %v1228 = vand.u32 %v202, 4294901760
    %v1229 = vsub.f32 %v202, %v1228
    %v1230 = vand.u32 %v1229, 4294901760
    %1231 = vmatprep.subr.mxu0 %v1230
    %v1232 = vand.u32 %v201, 4294901760
    %v1233 = vsub.f32 %v201, %v1232
    %v1234 = vand.u32 %v1233, 4294901760
    %1235 = vmatpush1.msra.mxu0 %v1234
    %v1236 = vand.u32 %v204, 4294901760
    %v1237 = vsub.f32 %v204, %v1236
    %v1238 = vand.u32 %v1237, 4294901760
    %1239 = vmatprep.subr.mxu0 %v1238
    %v1240 = vand.u32 %v203, 4294901760
    %v1241 = vsub.f32 %v203, %v1240
    %v1242 = vand.u32 %v1241, 4294901760
    %1243 = vmatpush1.msra.mxu0 %v1242
    %v1244 = vand.u32 %v206, 4294901760
    %v1245 = vsub.f32 %v206, %v1244
    %v1246 = vand.u32 %v1245, 4294901760
    %1247 = vmatprep.subr.mxu0 %v1246
    %v1248 = vand.u32 %v205, 4294901760
    %v1249 = vsub.f32 %v205, %v1248
    %v1250 = vand.u32 %v1249, 4294901760
    %1251 = vmatpush1.msra.mxu0 %v1250
    %v1252 = vand.u32 %v208, 4294901760
    %v1253 = vsub.f32 %v208, %v1252
    %v1254 = vand.u32 %v1253, 4294901760
    %1255 = vmatprep.subr.mxu0 %v1254
    %v1256 = vand.u32 %v207, 4294901760
    %v1257 = vsub.f32 %v207, %v1256
    %v1258 = vand.u32 %v1257, 4294901760
    %1259 = vmatpush1.msra.mxu0 %v1258
    %v1260 = vand.u32 %v210, 4294901760
    %v1261 = vsub.f32 %v210, %v1260
    %v1262 = vand.u32 %v1261, 4294901760
    %1263 = vmatprep.subr.mxu0 %v1262
    %v1264 = vand.u32 %v209, 4294901760
    %v1265 = vsub.f32 %v209, %v1264
    %v1266 = vand.u32 %v1265, 4294901760
    %1267 = vmatpush1.msra.mxu0 %v1266
    %v1268 = vand.u32 %v212, 4294901760
    %v1269 = vsub.f32 %v212, %v1268
    %v1270 = vand.u32 %v1269, 4294901760
    %1271 = vmatprep.subr.mxu0 %v1270
    %v1272 = vand.u32 %v211, 4294901760
    %v1273 = vsub.f32 %v211, %v1272
    %v1274 = vand.u32 %v1273, 4294901760
    %1275 = vmatpush1.msra.mxu0 %v1274
    %v1276 = vand.u32 %v214, 4294901760
    %v1277 = vsub.f32 %v214, %v1276
    %v1278 = vand.u32 %v1277, 4294901760
    %1279 = vmatprep.subr.mxu0 %v1278
    %v1280 = vand.u32 %v213, 4294901760
    %v1281 = vsub.f32 %v213, %v1280
    %v1282 = vand.u32 %v1281, 4294901760
    %1283 = vmatpush1.msra.mxu0 %v1282
    %v1284 = vand.u32 %v216, 4294901760
    %v1285 = vsub.f32 %v216, %v1284
    %v1286 = vand.u32 %v1285, 4294901760
    %1287 = vmatprep.subr.mxu0 %v1286
    %v1288 = vand.u32 %v215, 4294901760
    %v1289 = vsub.f32 %v215, %v1288
    %v1290 = vand.u32 %v1289, 4294901760
    %1291 = vmatpush1.msra.mxu0 %v1290
    %v1292 = vand.u32 %v218, 4294901760
    %v1293 = vsub.f32 %v218, %v1292
    %v1294 = vand.u32 %v1293, 4294901760
    %1295 = vmatprep.subr.mxu0 %v1294
    %v1296 = vand.u32 %v217, 4294901760
    %v1297 = vsub.f32 %v217, %v1296
    %v1298 = vand.u32 %v1297, 4294901760
    %1299 = vmatpush1.msra.mxu0 %v1298
    %v1300 = vand.u32 %v220, 4294901760
    %v1301 = vsub.f32 %v220, %v1300
    %v1302 = vand.u32 %v1301, 4294901760
    %1303 = vmatprep.subr.mxu0 %v1302
    %v1304 = vand.u32 %v219, 4294901760
    %v1305 = vsub.f32 %v219, %v1304
    %v1306 = vand.u32 %v1305, 4294901760
    %1307 = vmatpush1.msra.mxu0 %v1306
    %v1308 = vand.u32 %v222, 4294901760
    %v1309 = vsub.f32 %v222, %v1308
    %v1310 = vand.u32 %v1309, 4294901760
    %1311 = vmatprep.subr.mxu0 %v1310
    %v1312 = vand.u32 %v221, 4294901760
    %v1313 = vsub.f32 %v221, %v1312
    %v1314 = vand.u32 %v1313, 4294901760
    %1315 = vmatpush1.msra.mxu0 %v1314
    %v1316 = vand.u32 %v224, 4294901760
    %v1317 = vsub.f32 %v224, %v1316
    %v1318 = vand.u32 %v1317, 4294901760
    %1319 = vmatprep.subr.mxu0 %v1318
    %v1320 = vand.u32 %v223, 4294901760
    %v1321 = vsub.f32 %v223, %v1320
    %v1322 = vand.u32 %v1321, 4294901760
    %1323 = vmatpush1.msra.mxu0 %v1322
    %v1324 = vand.u32 %v226, 4294901760
    %v1325 = vsub.f32 %v226, %v1324
    %v1326 = vand.u32 %v1325, 4294901760
    %1327 = vmatprep.subr.mxu0 %v1326
    %v1328 = vand.u32 %v225, 4294901760
    %v1329 = vsub.f32 %v225, %v1328
    %v1330 = vand.u32 %v1329, 4294901760
    %1331 = vmatpush1.msra.mxu0 %v1330
    %v1332 = vand.u32 %v228, 4294901760
    %v1333 = vsub.f32 %v228, %v1332
    %v1334 = vand.u32 %v1333, 4294901760
    %1335 = vmatprep.subr.mxu0 %v1334
    %v1336 = vand.u32 %v227, 4294901760
    %v1337 = vsub.f32 %v227, %v1336
    %v1338 = vand.u32 %v1337, 4294901760
    %1339 = vmatpush1.msra.mxu0 %v1338
    %v1340 = vand.u32 %v230, 4294901760
    %v1341 = vsub.f32 %v230, %v1340
    %v1342 = vand.u32 %v1341, 4294901760
    %1343 = vmatprep.subr.mxu0 %v1342
    %v1344 = vand.u32 %v229, 4294901760
    %v1345 = vsub.f32 %v229, %v1344
    %v1346 = vand.u32 %v1345, 4294901760
    %1347 = vmatpush1.msra.mxu0 %v1346
    %v1348 = vand.u32 %v232, 4294901760
    %v1349 = vsub.f32 %v232, %v1348
    %v1350 = vand.u32 %v1349, 4294901760
    %1351 = vmatprep.subr.mxu0 %v1350
    %v1352 = vand.u32 %v231, 4294901760
    %v1353 = vsub.f32 %v231, %v1352
    %v1354 = vand.u32 %v1353, 4294901760
    %1355 = vmatpush1.msra.mxu0 %v1354
    %v1356 = vand.u32 %v234, 4294901760
    %v1357 = vsub.f32 %v234, %v1356
    %v1358 = vand.u32 %v1357, 4294901760
    %1359 = vmatprep.subr.mxu0 %v1358
    %v1360 = vand.u32 %v233, 4294901760
    %v1361 = vsub.f32 %v233, %v1360
    %v1362 = vand.u32 %v1361, 4294901760
    %1363 = vmatpush1.msra.mxu0 %v1362
    %v1364 = vand.u32 %v236, 4294901760
    %v1365 = vsub.f32 %v236, %v1364
    %v1366 = vand.u32 %v1365, 4294901760
    %1367 = vmatprep.subr.mxu0 %v1366
    %v1368 = vand.u32 %v235, 4294901760
    %v1369 = vsub.f32 %v235, %v1368
    %v1370 = vand.u32 %v1369, 4294901760
    %1371 = vmatpush1.msra.mxu0 %v1370
    %v1372 = vand.u32 %v238, 4294901760
    %v1373 = vsub.f32 %v238, %v1372
    %v1374 = vand.u32 %v1373, 4294901760
    %1375 = vmatprep.subr.mxu0 %v1374
    %v1376 = vand.u32 %v237, 4294901760
    %v1377 = vsub.f32 %v237, %v1376
    %v1378 = vand.u32 %v1377, 4294901760
    %1379 = vmatpush1.msra.mxu0 %v1378
    %v1380 = vand.u32 %v240, 4294901760
    %v1381 = vsub.f32 %v240, %v1380
    %v1382 = vand.u32 %v1381, 4294901760
    %1383 = vmatprep.subr.mxu0 %v1382
    %v1384 = vand.u32 %v239, 4294901760
    %v1385 = vsub.f32 %v239, %v1384
    %v1386 = vand.u32 %v1385, 4294901760
    %1387 = vmatpush1.msra.mxu0 %v1386
    %v1388 = vand.u32 %v247, 4294901760
    %1389 = vmatprep.mubr.f32.mxu0 %v1388
    %v1390 = vand.u32 %v246, 4294901760
    %1391 = vmatmul.mubr.f32.gmra.mrb[0].mxu0 %v1390
    %v1392 = vpop.f32.mrb[0].mxu0
    %v1393 = vadd.f32 %v1128, %v1392
    %v1394 = vpop.f32.mrb[0].mxu0
    %v1395 = vadd.f32 %v1130, %v1394
    %1396 = vdwg.mxu0
    %v1397 = vand.u32 %v178, 4294901760
    %1398 = vmatprep.subr.mxu0 %v1397
    %v1399 = vand.u32 %v177, 4294901760
    %1400 = vmatpush1.msra.mxu0 %v1399
    %v1401 = vand.u32 %v180, 4294901760
    %1402 = vmatprep.subr.mxu0 %v1401
    %v1403 = vand.u32 %v179, 4294901760
    %1404 = vmatpush1.msra.mxu0 %v1403
    %v1405 = vand.u32 %v182, 4294901760
    %1406 = vmatprep.subr.mxu0 %v1405
    %v1407 = vand.u32 %v181, 4294901760
    %1408 = vmatpush1.msra.mxu0 %v1407
    %v1409 = vand.u32 %v184, 4294901760
    %1410 = vmatprep.subr.mxu0 %v1409
    %v1411 = vand.u32 %v183, 4294901760
    %1412 = vmatpush1.msra.mxu0 %v1411
    %v1413 = vand.u32 %v186, 4294901760
    %1414 = vmatprep.subr.mxu0 %v1413
    %v1415 = vand.u32 %v185, 4294901760
    %1416 = vmatpush1.msra.mxu0 %v1415
    %v1417 = vand.u32 %v188, 4294901760
    %1418 = vmatprep.subr.mxu0 %v1417
    %v1419 = vand.u32 %v187, 4294901760
    %1420 = vmatpush1.msra.mxu0 %v1419
    %v1421 = vand.u32 %v190, 4294901760
    %1422 = vmatprep.subr.mxu0 %v1421
    %v1423 = vand.u32 %v189, 4294901760
    %1424 = vmatpush1.msra.mxu0 %v1423
    %v1425 = vand.u32 %v192, 4294901760
    %1426 = vmatprep.subr.mxu0 %v1425
    %v1427 = vand.u32 %v191, 4294901760
    %1428 = vmatpush1.msra.mxu0 %v1427
    %v1429 = vand.u32 %v194, 4294901760
    %1430 = vmatprep.subr.mxu0 %v1429
    %v1431 = vand.u32 %v193, 4294901760
    %1432 = vmatpush1.msra.mxu0 %v1431
    %v1433 = vand.u32 %v196, 4294901760
    %1434 = vmatprep.subr.mxu0 %v1433
    %v1435 = vand.u32 %v195, 4294901760
    %1436 = vmatpush1.msra.mxu0 %v1435
    %v1437 = vand.u32 %v198, 4294901760
    %1438 = vmatprep.subr.mxu0 %v1437
    %v1439 = vand.u32 %v197, 4294901760
    %1440 = vmatpush1.msra.mxu0 %v1439
    %v1441 = vand.u32 %v200, 4294901760
    %1442 = vmatprep.subr.mxu0 %v1441
    %v1443 = vand.u32 %v199, 4294901760
    %1444 = vmatpush1.msra.mxu0 %v1443
    %v1445 = vand.u32 %v202, 4294901760
    %1446 = vmatprep.subr.mxu0 %v1445
    %v1447 = vand.u32 %v201, 4294901760
    %1448 = vmatpush1.msra.mxu0 %v1447
    %v1449 = vand.u32 %v204, 4294901760
    %1450 = vmatprep.subr.mxu0 %v1449
    %v1451 = vand.u32 %v203, 4294901760
    %1452 = vmatpush1.msra.mxu0 %v1451
    %v1453 = vand.u32 %v206, 4294901760
    %1454 = vmatprep.subr.mxu0 %v1453
    %v1455 = vand.u32 %v205, 4294901760
    %1456 = vmatpush1.msra.mxu0 %v1455
    %v1457 = vand.u32 %v208, 4294901760
    %1458 = vmatprep.subr.mxu0 %v1457
    %v1459 = vand.u32 %v207, 4294901760
    %1460 = vmatpush1.msra.mxu0 %v1459
    %v1461 = vand.u32 %v210, 4294901760
    %1462 = vmatprep.subr.mxu0 %v1461
    %v1463 = vand.u32 %v209, 4294901760
    %1464 = vmatpush1.msra.mxu0 %v1463
    %v1465 = vand.u32 %v212, 4294901760
    %1466 = vmatprep.subr.mxu0 %v1465
    %v1467 = vand.u32 %v211, 4294901760
    %1468 = vmatpush1.msra.mxu0 %v1467
    %v1469 = vand.u32 %v214, 4294901760
    %1470 = vmatprep.subr.mxu0 %v1469
    %v1471 = vand.u32 %v213, 4294901760
    %1472 = vmatpush1.msra.mxu0 %v1471
    %v1473 = vand.u32 %v216, 4294901760
    %1474 = vmatprep.subr.mxu0 %v1473
    %v1475 = vand.u32 %v215, 4294901760
    %1476 = vmatpush1.msra.mxu0 %v1475
    %v1477 = vand.u32 %v218, 4294901760
    %1478 = vmatprep.subr.mxu0 %v1477
    %v1479 = vand.u32 %v217, 4294901760
    %1480 = vmatpush1.msra.mxu0 %v1479
    %v1481 = vand.u32 %v220, 4294901760
    %1482 = vmatprep.subr.mxu0 %v1481
    %v1483 = vand.u32 %v219, 4294901760
    %1484 = vmatpush1.msra.mxu0 %v1483
    %v1485 = vand.u32 %v222, 4294901760
    %1486 = vmatprep.subr.mxu0 %v1485
    %v1487 = vand.u32 %v221, 4294901760
    %1488 = vmatpush1.msra.mxu0 %v1487
    %v1489 = vand.u32 %v224, 4294901760
    %1490 = vmatprep.subr.mxu0 %v1489
    %v1491 = vand.u32 %v223, 4294901760
    %1492 = vmatpush1.msra.mxu0 %v1491
    %v1493 = vand.u32 %v226, 4294901760
    %1494 = vmatprep.subr.mxu0 %v1493
    %v1495 = vand.u32 %v225, 4294901760
    %1496 = vmatpush1.msra.mxu0 %v1495
    %v1497 = vand.u32 %v228, 4294901760
    %1498 = vmatprep.subr.mxu0 %v1497
    %v1499 = vand.u32 %v227, 4294901760
    %1500 = vmatpush1.msra.mxu0 %v1499
    %v1501 = vand.u32 %v230, 4294901760
    %1502 = vmatprep.subr.mxu0 %v1501
    %v1503 = vand.u32 %v229, 4294901760
    %1504 = vmatpush1.msra.mxu0 %v1503
    %v1505 = vand.u32 %v232, 4294901760
    %1506 = vmatprep.subr.mxu0 %v1505
    %v1507 = vand.u32 %v231, 4294901760
    %1508 = vmatpush1.msra.mxu0 %v1507
    %v1509 = vand.u32 %v234, 4294901760
    %1510 = vmatprep.subr.mxu0 %v1509
    %v1511 = vand.u32 %v233, 4294901760
    %1512 = vmatpush1.msra.mxu0 %v1511
    %v1513 = vand.u32 %v236, 4294901760
    %1514 = vmatprep.subr.mxu0 %v1513
    %v1515 = vand.u32 %v235, 4294901760
    %1516 = vmatpush1.msra.mxu0 %v1515
    %v1517 = vand.u32 %v238, 4294901760
    %1518 = vmatprep.subr.mxu0 %v1517
    %v1519 = vand.u32 %v237, 4294901760
    %1520 = vmatpush1.msra.mxu0 %v1519
    %v1521 = vand.u32 %v240, 4294901760
    %1522 = vmatprep.subr.mxu0 %v1521
    %v1523 = vand.u32 %v239, 4294901760
    %1524 = vmatpush1.msra.mxu0 %v1523
    %v1525 = vand.u32 %v247, 4294901760
    %1526 = vmatprep.mubr.f32.mxu0 %v1525
    %v1527 = vand.u32 %v246, 4294901760
    %1528 = vmatmul.mubr.f32.gmra.mrb[0].mxu0 %v1527
    %v1529 = vpop.f32.mrb[0].mxu0
    %v1530 = vadd.f32 %v1393, %v1529
    %v1531 = vpop.f32.mrb[0].mxu0
    %v1532 = vadd.f32 %v1395, %v1531
    %1533 = vdwg.mxu0
    %v1538 = vsel %vm245, %v73, %v59
    %v1539 = vsel %vm245, %v80, %v66
    %v1542 = vand.u32 %v114, 4294901760
    %1543 = vmatprep.subr.mxu0 %v1542
    %v1544 = vand.u32 %v113, 4294901760
    %1545 = vmatpush1.msra.mxu0 %v1544
    %v1546 = vand.u32 %v116, 4294901760
    %1547 = vmatprep.subr.mxu0 %v1546
    %v1548 = vand.u32 %v115, 4294901760
    %1549 = vmatpush1.msra.mxu0 %v1548
    %v1550 = vand.u32 %v118, 4294901760
    %1551 = vmatprep.subr.mxu0 %v1550
    %v1552 = vand.u32 %v117, 4294901760
    %1553 = vmatpush1.msra.mxu0 %v1552
    %v1554 = vand.u32 %v120, 4294901760
    %1555 = vmatprep.subr.mxu0 %v1554
    %v1556 = vand.u32 %v119, 4294901760
    %1557 = vmatpush1.msra.mxu0 %v1556
    %v1558 = vand.u32 %v122, 4294901760
    %1559 = vmatprep.subr.mxu0 %v1558
    %v1560 = vand.u32 %v121, 4294901760
    %1561 = vmatpush1.msra.mxu0 %v1560
    %v1562 = vand.u32 %v124, 4294901760
    %1563 = vmatprep.subr.mxu0 %v1562
    %v1564 = vand.u32 %v123, 4294901760
    %1565 = vmatpush1.msra.mxu0 %v1564
    %v1566 = vand.u32 %v126, 4294901760
    %1567 = vmatprep.subr.mxu0 %v1566
    %v1568 = vand.u32 %v125, 4294901760
    %1569 = vmatpush1.msra.mxu0 %v1568
    %v1570 = vand.u32 %v128, 4294901760
    %1571 = vmatprep.subr.mxu0 %v1570
    %v1572 = vand.u32 %v127, 4294901760
    %1573 = vmatpush1.msra.mxu0 %v1572
    %v1574 = vand.u32 %v130, 4294901760
    %1575 = vmatprep.subr.mxu0 %v1574
    %v1576 = vand.u32 %v129, 4294901760
    %1577 = vmatpush1.msra.mxu0 %v1576
    %v1578 = vand.u32 %v132, 4294901760
    %1579 = vmatprep.subr.mxu0 %v1578
    %v1580 = vand.u32 %v131, 4294901760
    %1581 = vmatpush1.msra.mxu0 %v1580
    %v1582 = vand.u32 %v134, 4294901760
    %1583 = vmatprep.subr.mxu0 %v1582
    %v1584 = vand.u32 %v133, 4294901760
    %1585 = vmatpush1.msra.mxu0 %v1584
    %v1586 = vand.u32 %v136, 4294901760
    %1587 = vmatprep.subr.mxu0 %v1586
    %v1588 = vand.u32 %v135, 4294901760
    %1589 = vmatpush1.msra.mxu0 %v1588
    %v1590 = vand.u32 %v138, 4294901760
    %1591 = vmatprep.subr.mxu0 %v1590
    %v1592 = vand.u32 %v137, 4294901760
    %1593 = vmatpush1.msra.mxu0 %v1592
    %v1594 = vand.u32 %v140, 4294901760
    %1595 = vmatprep.subr.mxu0 %v1594
    %v1596 = vand.u32 %v139, 4294901760
    %1597 = vmatpush1.msra.mxu0 %v1596
    %v1598 = vand.u32 %v142, 4294901760
    %1599 = vmatprep.subr.mxu0 %v1598
    %v1600 = vand.u32 %v141, 4294901760
    %1601 = vmatpush1.msra.mxu0 %v1600
    %v1602 = vand.u32 %v144, 4294901760
    %1603 = vmatprep.subr.mxu0 %v1602
    %v1604 = vand.u32 %v143, 4294901760
    %1605 = vmatpush1.msra.mxu0 %v1604
    %v1606 = vand.u32 %v146, 4294901760
    %1607 = vmatprep.subr.mxu0 %v1606
    %v1608 = vand.u32 %v145, 4294901760
    %1609 = vmatpush1.msra.mxu0 %v1608
    %v1610 = vand.u32 %v148, 4294901760
    %1611 = vmatprep.subr.mxu0 %v1610
    %v1612 = vand.u32 %v147, 4294901760
    %1613 = vmatpush1.msra.mxu0 %v1612
    %v1614 = vand.u32 %v150, 4294901760
    %1615 = vmatprep.subr.mxu0 %v1614
    %v1616 = vand.u32 %v149, 4294901760
    %1617 = vmatpush1.msra.mxu0 %v1616
    %v1618 = vand.u32 %v152, 4294901760
    %1619 = vmatprep.subr.mxu0 %v1618
    %v1620 = vand.u32 %v151, 4294901760
    %1621 = vmatpush1.msra.mxu0 %v1620
    %v1622 = vand.u32 %v154, 4294901760
    %1623 = vmatprep.subr.mxu0 %v1622
    %v1624 = vand.u32 %v153, 4294901760
    %1625 = vmatpush1.msra.mxu0 %v1624
    %v1626 = vand.u32 %v156, 4294901760
    %1627 = vmatprep.subr.mxu0 %v1626
    %v1628 = vand.u32 %v155, 4294901760
    %1629 = vmatpush1.msra.mxu0 %v1628
    %v1630 = vand.u32 %v158, 4294901760
    %1631 = vmatprep.subr.mxu0 %v1630
    %v1632 = vand.u32 %v157, 4294901760
    %1633 = vmatpush1.msra.mxu0 %v1632
    %v1634 = vand.u32 %v160, 4294901760
    %1635 = vmatprep.subr.mxu0 %v1634
    %v1636 = vand.u32 %v159, 4294901760
    %1637 = vmatpush1.msra.mxu0 %v1636
    %v1638 = vand.u32 %v162, 4294901760
    %1639 = vmatprep.subr.mxu0 %v1638
    %v1640 = vand.u32 %v161, 4294901760
    %1641 = vmatpush1.msra.mxu0 %v1640
    %v1642 = vand.u32 %v164, 4294901760
    %1643 = vmatprep.subr.mxu0 %v1642
    %v1644 = vand.u32 %v163, 4294901760
    %1645 = vmatpush1.msra.mxu0 %v1644
    %v1646 = vand.u32 %v166, 4294901760
    %1647 = vmatprep.subr.mxu0 %v1646
    %v1648 = vand.u32 %v165, 4294901760
    %1649 = vmatpush1.msra.mxu0 %v1648
    %v1650 = vand.u32 %v168, 4294901760
    %1651 = vmatprep.subr.mxu0 %v1650
    %v1652 = vand.u32 %v167, 4294901760
    %1653 = vmatpush1.msra.mxu0 %v1652
    %v1654 = vand.u32 %v170, 4294901760
    %1655 = vmatprep.subr.mxu0 %v1654
    %v1656 = vand.u32 %v169, 4294901760
    %1657 = vmatpush1.msra.mxu0 %v1656
    %v1658 = vand.u32 %v172, 4294901760
    %1659 = vmatprep.subr.mxu0 %v1658
    %v1660 = vand.u32 %v171, 4294901760
    %1661 = vmatpush1.msra.mxu0 %v1660
    %v1662 = vand.u32 %v174, 4294901760
    %1663 = vmatprep.subr.mxu0 %v1662
    %v1664 = vand.u32 %v173, 4294901760
    %1665 = vmatpush1.msra.mxu0 %v1664
    %v1666 = vand.u32 %v176, 4294901760
    %1667 = vmatprep.subr.mxu0 %v1666
    %v1668 = vand.u32 %v175, 4294901760
    %1669 = vmatpush1.msra.mxu0 %v1668
    %v1670 = vand.u32 %v1539, 4294901760
    %v1671 = vsub.f32 %v1539, %v1670
    %v1672 = vand.u32 %v1671, 4294901760
    %v1673 = vsub.f32 %v1671, %v1672
    %v1674 = vand.u32 %v1673, 4294901760
    %1675 = vmatprep.mubr.f32.mxu0 %v1674
    %v1676 = vand.u32 %v1538, 4294901760
    %v1677 = vsub.f32 %v1538, %v1676
    %v1678 = vand.u32 %v1677, 4294901760
    %v1679 = vsub.f32 %v1677, %v1678
    %v1680 = vand.u32 %v1679, 4294901760
    %1681 = vmatmul.mubr.f32.gmra.mrb[0].mxu0 %v1680
    %v1682 = vpop.f32.mrb[0].mxu0
    %v1683 = vadd.f32 %v1530, %v1682
    %v1684 = vpop.f32.mrb[0].mxu0
    %v1685 = vadd.f32 %v1532, %v1684
    %1686 = vdwg.mxu0
    %v1687 = vand.u32 %v114, 4294901760
    %v1688 = vsub.f32 %v114, %v1687
    %v1689 = vand.u32 %v1688, 4294901760
    %v1690 = vsub.f32 %v1688, %v1689
    %v1691 = vand.u32 %v1690, 4294901760
    %1692 = vmatprep.subr.mxu0 %v1691
    %v1693 = vand.u32 %v113, 4294901760
    %v1694 = vsub.f32 %v113, %v1693
    %v1695 = vand.u32 %v1694, 4294901760
    %v1696 = vsub.f32 %v1694, %v1695
    %v1697 = vand.u32 %v1696, 4294901760
    %1698 = vmatpush1.msra.mxu0 %v1697
    %v1699 = vand.u32 %v116, 4294901760
    %v1700 = vsub.f32 %v116, %v1699
    %v1701 = vand.u32 %v1700, 4294901760
    %v1702 = vsub.f32 %v1700, %v1701
    %v1703 = vand.u32 %v1702, 4294901760
    %1704 = vmatprep.subr.mxu0 %v1703
    %v1705 = vand.u32 %v115, 4294901760
    %v1706 = vsub.f32 %v115, %v1705
    %v1707 = vand.u32 %v1706, 4294901760
    %v1708 = vsub.f32 %v1706, %v1707
    %v1709 = vand.u32 %v1708, 4294901760
    %1710 = vmatpush1.msra.mxu0 %v1709
    %v1711 = vand.u32 %v118, 4294901760
    %v1712 = vsub.f32 %v118, %v1711
    %v1713 = vand.u32 %v1712, 4294901760
    %v1714 = vsub.f32 %v1712, %v1713
    %v1715 = vand.u32 %v1714, 4294901760
    %1716 = vmatprep.subr.mxu0 %v1715
    %v1717 = vand.u32 %v117, 4294901760
    %v1718 = vsub.f32 %v117, %v1717
    %v1719 = vand.u32 %v1718, 4294901760
    %v1720 = vsub.f32 %v1718, %v1719
    %v1721 = vand.u32 %v1720, 4294901760
    %1722 = vmatpush1.msra.mxu0 %v1721
    %v1723 = vand.u32 %v120, 4294901760
    %v1724 = vsub.f32 %v120, %v1723
    %v1725 = vand.u32 %v1724, 4294901760
    %v1726 = vsub.f32 %v1724, %v1725
    %v1727 = vand.u32 %v1726, 4294901760
    %1728 = vmatprep.subr.mxu0 %v1727
    %v1729 = vand.u32 %v119, 4294901760
    %v1730 = vsub.f32 %v119, %v1729
    %v1731 = vand.u32 %v1730, 4294901760
    %v1732 = vsub.f32 %v1730, %v1731
    %v1733 = vand.u32 %v1732, 4294901760
    %1734 = vmatpush1.msra.mxu0 %v1733
    %v1735 = vand.u32 %v122, 4294901760
    %v1736 = vsub.f32 %v122, %v1735
    %v1737 = vand.u32 %v1736, 4294901760
    %v1738 = vsub.f32 %v1736, %v1737
    %v1739 = vand.u32 %v1738, 4294901760
    %1740 = vmatprep.subr.mxu0 %v1739
    %v1741 = vand.u32 %v121, 4294901760
    %v1742 = vsub.f32 %v121, %v1741
    %v1743 = vand.u32 %v1742, 4294901760
    %v1744 = vsub.f32 %v1742, %v1743
    %v1745 = vand.u32 %v1744, 4294901760
    %1746 = vmatpush1.msra.mxu0 %v1745
    %v1747 = vand.u32 %v124, 4294901760
    %v1748 = vsub.f32 %v124, %v1747
    %v1749 = vand.u32 %v1748, 4294901760
    %v1750 = vsub.f32 %v1748, %v1749
    %v1751 = vand.u32 %v1750, 4294901760
    %1752 = vmatprep.subr.mxu0 %v1751
    %v1753 = vand.u32 %v123, 4294901760
    %v1754 = vsub.f32 %v123, %v1753
    %v1755 = vand.u32 %v1754, 4294901760
    %v1756 = vsub.f32 %v1754, %v1755
    %v1757 = vand.u32 %v1756, 4294901760
    %1758 = vmatpush1.msra.mxu0 %v1757
    %v1759 = vand.u32 %v126, 4294901760
    %v1760 = vsub.f32 %v126, %v1759
    %v1761 = vand.u32 %v1760, 4294901760
    %v1762 = vsub.f32 %v1760, %v1761
    %v1763 = vand.u32 %v1762, 4294901760
    %1764 = vmatprep.subr.mxu0 %v1763
    %v1765 = vand.u32 %v125, 4294901760
    %v1766 = vsub.f32 %v125, %v1765
    %v1767 = vand.u32 %v1766, 4294901760
    %v1768 = vsub.f32 %v1766, %v1767
    %v1769 = vand.u32 %v1768, 4294901760
    %1770 = vmatpush1.msra.mxu0 %v1769
    %v1771 = vand.u32 %v128, 4294901760
    %v1772 = vsub.f32 %v128, %v1771
    %v1773 = vand.u32 %v1772, 4294901760
    %v1774 = vsub.f32 %v1772, %v1773
    %v1775 = vand.u32 %v1774, 4294901760
    %1776 = vmatprep.subr.mxu0 %v1775
    %v1777 = vand.u32 %v127, 4294901760
    %v1778 = vsub.f32 %v127, %v1777
    %v1779 = vand.u32 %v1778, 4294901760
    %v1780 = vsub.f32 %v1778, %v1779
    %v1781 = vand.u32 %v1780, 4294901760
    %1782 = vmatpush1.msra.mxu0 %v1781
    %v1783 = vand.u32 %v130, 4294901760
    %v1784 = vsub.f32 %v130, %v1783
    %v1785 = vand.u32 %v1784, 4294901760
    %v1786 = vsub.f32 %v1784, %v1785
    %v1787 = vand.u32 %v1786, 4294901760
    %1788 = vmatprep.subr.mxu0 %v1787
    %v1789 = vand.u32 %v129, 4294901760
    %v1790 = vsub.f32 %v129, %v1789
    %v1791 = vand.u32 %v1790, 4294901760
    %v1792 = vsub.f32 %v1790, %v1791
    %v1793 = vand.u32 %v1792, 4294901760
    %1794 = vmatpush1.msra.mxu0 %v1793
    %v1795 = vand.u32 %v132, 4294901760
    %v1796 = vsub.f32 %v132, %v1795
    %v1797 = vand.u32 %v1796, 4294901760
    %v1798 = vsub.f32 %v1796, %v1797
    %v1799 = vand.u32 %v1798, 4294901760
    %1800 = vmatprep.subr.mxu0 %v1799
    %v1801 = vand.u32 %v131, 4294901760
    %v1802 = vsub.f32 %v131, %v1801
    %v1803 = vand.u32 %v1802, 4294901760
    %v1804 = vsub.f32 %v1802, %v1803
    %v1805 = vand.u32 %v1804, 4294901760
    %1806 = vmatpush1.msra.mxu0 %v1805
    %v1807 = vand.u32 %v134, 4294901760
    %v1808 = vsub.f32 %v134, %v1807
    %v1809 = vand.u32 %v1808, 4294901760
    %v1810 = vsub.f32 %v1808, %v1809
    %v1811 = vand.u32 %v1810, 4294901760
    %1812 = vmatprep.subr.mxu0 %v1811
    %v1813 = vand.u32 %v133, 4294901760
    %v1814 = vsub.f32 %v133, %v1813
    %v1815 = vand.u32 %v1814, 4294901760
    %v1816 = vsub.f32 %v1814, %v1815
    %v1817 = vand.u32 %v1816, 4294901760
    %1818 = vmatpush1.msra.mxu0 %v1817
    %v1819 = vand.u32 %v136, 4294901760
    %v1820 = vsub.f32 %v136, %v1819
    %v1821 = vand.u32 %v1820, 4294901760
    %v1822 = vsub.f32 %v1820, %v1821
    %v1823 = vand.u32 %v1822, 4294901760
    %1824 = vmatprep.subr.mxu0 %v1823
    %v1825 = vand.u32 %v135, 4294901760
    %v1826 = vsub.f32 %v135, %v1825
    %v1827 = vand.u32 %v1826, 4294901760
    %v1828 = vsub.f32 %v1826, %v1827
    %v1829 = vand.u32 %v1828, 4294901760
    %1830 = vmatpush1.msra.mxu0 %v1829
    %v1831 = vand.u32 %v138, 4294901760
    %v1832 = vsub.f32 %v138, %v1831
    %v1833 = vand.u32 %v1832, 4294901760
    %v1834 = vsub.f32 %v1832, %v1833
    %v1835 = vand.u32 %v1834, 4294901760
    %1836 = vmatprep.subr.mxu0 %v1835
    %v1837 = vand.u32 %v137, 4294901760
    %v1838 = vsub.f32 %v137, %v1837
    %v1839 = vand.u32 %v1838, 4294901760
    %v1840 = vsub.f32 %v1838, %v1839
    %v1841 = vand.u32 %v1840, 4294901760
    %1842 = vmatpush1.msra.mxu0 %v1841
    %v1843 = vand.u32 %v140, 4294901760
    %v1844 = vsub.f32 %v140, %v1843
    %v1845 = vand.u32 %v1844, 4294901760
    %v1846 = vsub.f32 %v1844, %v1845
    %v1847 = vand.u32 %v1846, 4294901760
    %1848 = vmatprep.subr.mxu0 %v1847
    %v1849 = vand.u32 %v139, 4294901760
    %v1850 = vsub.f32 %v139, %v1849
    %v1851 = vand.u32 %v1850, 4294901760
    %v1852 = vsub.f32 %v1850, %v1851
    %v1853 = vand.u32 %v1852, 4294901760
    %1854 = vmatpush1.msra.mxu0 %v1853
    %v1855 = vand.u32 %v142, 4294901760
    %v1856 = vsub.f32 %v142, %v1855
    %v1857 = vand.u32 %v1856, 4294901760
    %v1858 = vsub.f32 %v1856, %v1857
    %v1859 = vand.u32 %v1858, 4294901760
    %1860 = vmatprep.subr.mxu0 %v1859
    %v1861 = vand.u32 %v141, 4294901760
    %v1862 = vsub.f32 %v141, %v1861
    %v1863 = vand.u32 %v1862, 4294901760
    %v1864 = vsub.f32 %v1862, %v1863
    %v1865 = vand.u32 %v1864, 4294901760
    %1866 = vmatpush1.msra.mxu0 %v1865
    %v1867 = vand.u32 %v144, 4294901760
    %v1868 = vsub.f32 %v144, %v1867
    %v1869 = vand.u32 %v1868, 4294901760
    %v1870 = vsub.f32 %v1868, %v1869
    %v1871 = vand.u32 %v1870, 4294901760
    %1872 = vmatprep.subr.mxu0 %v1871
    %v1873 = vand.u32 %v143, 4294901760
    %v1874 = vsub.f32 %v143, %v1873
    %v1875 = vand.u32 %v1874, 4294901760
    %v1876 = vsub.f32 %v1874, %v1875
    %v1877 = vand.u32 %v1876, 4294901760
    %1878 = vmatpush1.msra.mxu0 %v1877
    %v1879 = vand.u32 %v146, 4294901760
    %v1880 = vsub.f32 %v146, %v1879
    %v1881 = vand.u32 %v1880, 4294901760
    %v1882 = vsub.f32 %v1880, %v1881
    %v1883 = vand.u32 %v1882, 4294901760
    %1884 = vmatprep.subr.mxu0 %v1883
    %v1885 = vand.u32 %v145, 4294901760
    %v1886 = vsub.f32 %v145, %v1885
    %v1887 = vand.u32 %v1886, 4294901760
    %v1888 = vsub.f32 %v1886, %v1887
    %v1889 = vand.u32 %v1888, 4294901760
    %1890 = vmatpush1.msra.mxu0 %v1889
    %v1891 = vand.u32 %v148, 4294901760
    %v1892 = vsub.f32 %v148, %v1891
    %v1893 = vand.u32 %v1892, 4294901760
    %v1894 = vsub.f32 %v1892, %v1893
    %v1895 = vand.u32 %v1894, 4294901760
    %1896 = vmatprep.subr.mxu0 %v1895
    %v1897 = vand.u32 %v147, 4294901760
    %v1898 = vsub.f32 %v147, %v1897
    %v1899 = vand.u32 %v1898, 4294901760
    %v1900 = vsub.f32 %v1898, %v1899
    %v1901 = vand.u32 %v1900, 4294901760
    %1902 = vmatpush1.msra.mxu0 %v1901
    %v1903 = vand.u32 %v150, 4294901760
    %v1904 = vsub.f32 %v150, %v1903
    %v1905 = vand.u32 %v1904, 4294901760
    %v1906 = vsub.f32 %v1904, %v1905
    %v1907 = vand.u32 %v1906, 4294901760
    %1908 = vmatprep.subr.mxu0 %v1907
    %v1909 = vand.u32 %v149, 4294901760
    %v1910 = vsub.f32 %v149, %v1909
    %v1911 = vand.u32 %v1910, 4294901760
    %v1912 = vsub.f32 %v1910, %v1911
    %v1913 = vand.u32 %v1912, 4294901760
    %1914 = vmatpush1.msra.mxu0 %v1913
    %v1915 = vand.u32 %v152, 4294901760
    %v1916 = vsub.f32 %v152, %v1915
    %v1917 = vand.u32 %v1916, 4294901760
    %v1918 = vsub.f32 %v1916, %v1917
    %v1919 = vand.u32 %v1918, 4294901760
    %1920 = vmatprep.subr.mxu0 %v1919
    %v1921 = vand.u32 %v151, 4294901760
    %v1922 = vsub.f32 %v151, %v1921
    %v1923 = vand.u32 %v1922, 4294901760
    %v1924 = vsub.f32 %v1922, %v1923
    %v1925 = vand.u32 %v1924, 4294901760
    %1926 = vmatpush1.msra.mxu0 %v1925
    %v1927 = vand.u32 %v154, 4294901760
    %v1928 = vsub.f32 %v154, %v1927
    %v1929 = vand.u32 %v1928, 4294901760
    %v1930 = vsub.f32 %v1928, %v1929
    %v1931 = vand.u32 %v1930, 4294901760
    %1932 = vmatprep.subr.mxu0 %v1931
    %v1933 = vand.u32 %v153, 4294901760
    %v1934 = vsub.f32 %v153, %v1933
    %v1935 = vand.u32 %v1934, 4294901760
    %v1936 = vsub.f32 %v1934, %v1935
    %v1937 = vand.u32 %v1936, 4294901760
    %1938 = vmatpush1.msra.mxu0 %v1937
    %v1939 = vand.u32 %v156, 4294901760
    %v1940 = vsub.f32 %v156, %v1939
    %v1941 = vand.u32 %v1940, 4294901760
    %v1942 = vsub.f32 %v1940, %v1941
    %v1943 = vand.u32 %v1942, 4294901760
    %1944 = vmatprep.subr.mxu0 %v1943
    %v1945 = vand.u32 %v155, 4294901760
    %v1946 = vsub.f32 %v155, %v1945
    %v1947 = vand.u32 %v1946, 4294901760
    %v1948 = vsub.f32 %v1946, %v1947
    %v1949 = vand.u32 %v1948, 4294901760
    %1950 = vmatpush1.msra.mxu0 %v1949
    %v1951 = vand.u32 %v158, 4294901760
    %v1952 = vsub.f32 %v158, %v1951
    %v1953 = vand.u32 %v1952, 4294901760
    %v1954 = vsub.f32 %v1952, %v1953
    %v1955 = vand.u32 %v1954, 4294901760
    %1956 = vmatprep.subr.mxu0 %v1955
    %v1957 = vand.u32 %v157, 4294901760
    %v1958 = vsub.f32 %v157, %v1957
    %v1959 = vand.u32 %v1958, 4294901760
    %v1960 = vsub.f32 %v1958, %v1959
    %v1961 = vand.u32 %v1960, 4294901760
    %1962 = vmatpush1.msra.mxu0 %v1961
    %v1963 = vand.u32 %v160, 4294901760
    %v1964 = vsub.f32 %v160, %v1963
    %v1965 = vand.u32 %v1964, 4294901760
    %v1966 = vsub.f32 %v1964, %v1965
    %v1967 = vand.u32 %v1966, 4294901760
    %1968 = vmatprep.subr.mxu0 %v1967
    %v1969 = vand.u32 %v159, 4294901760
    %v1970 = vsub.f32 %v159, %v1969
    %v1971 = vand.u32 %v1970, 4294901760
    %v1972 = vsub.f32 %v1970, %v1971
    %v1973 = vand.u32 %v1972, 4294901760
    %1974 = vmatpush1.msra.mxu0 %v1973
    %v1975 = vand.u32 %v162, 4294901760
    %v1976 = vsub.f32 %v162, %v1975
    %v1977 = vand.u32 %v1976, 4294901760
    %v1978 = vsub.f32 %v1976, %v1977
    %v1979 = vand.u32 %v1978, 4294901760
    %1980 = vmatprep.subr.mxu0 %v1979
    %v1981 = vand.u32 %v161, 4294901760
    %v1982 = vsub.f32 %v161, %v1981
    %v1983 = vand.u32 %v1982, 4294901760
    %v1984 = vsub.f32 %v1982, %v1983
    %v1985 = vand.u32 %v1984, 4294901760
    %1986 = vmatpush1.msra.mxu0 %v1985
    %v1987 = vand.u32 %v164, 4294901760
    %v1988 = vsub.f32 %v164, %v1987
    %v1989 = vand.u32 %v1988, 4294901760
    %v1990 = vsub.f32 %v1988, %v1989
    %v1991 = vand.u32 %v1990, 4294901760
    %1992 = vmatprep.subr.mxu0 %v1991
    %v1993 = vand.u32 %v163, 4294901760
    %v1994 = vsub.f32 %v163, %v1993
    %v1995 = vand.u32 %v1994, 4294901760
    %v1996 = vsub.f32 %v1994, %v1995
    %v1997 = vand.u32 %v1996, 4294901760
    %1998 = vmatpush1.msra.mxu0 %v1997
    %v1999 = vand.u32 %v166, 4294901760
    %v2000 = vsub.f32 %v166, %v1999
    %v2001 = vand.u32 %v2000, 4294901760
    %v2002 = vsub.f32 %v2000, %v2001
    %v2003 = vand.u32 %v2002, 4294901760
    %2004 = vmatprep.subr.mxu0 %v2003
    %v2005 = vand.u32 %v165, 4294901760
    %v2006 = vsub.f32 %v165, %v2005
    %v2007 = vand.u32 %v2006, 4294901760
    %v2008 = vsub.f32 %v2006, %v2007
    %v2009 = vand.u32 %v2008, 4294901760
    %2010 = vmatpush1.msra.mxu0 %v2009
    %v2011 = vand.u32 %v168, 4294901760
    %v2012 = vsub.f32 %v168, %v2011
    %v2013 = vand.u32 %v2012, 4294901760
    %v2014 = vsub.f32 %v2012, %v2013
    %v2015 = vand.u32 %v2014, 4294901760
    %2016 = vmatprep.subr.mxu0 %v2015
    %v2017 = vand.u32 %v167, 4294901760
    %v2018 = vsub.f32 %v167, %v2017
    %v2019 = vand.u32 %v2018, 4294901760
    %v2020 = vsub.f32 %v2018, %v2019
    %v2021 = vand.u32 %v2020, 4294901760
    %2022 = vmatpush1.msra.mxu0 %v2021
    %v2023 = vand.u32 %v170, 4294901760
    %v2024 = vsub.f32 %v170, %v2023
    %v2025 = vand.u32 %v2024, 4294901760
    %v2026 = vsub.f32 %v2024, %v2025
    %v2027 = vand.u32 %v2026, 4294901760
    %2028 = vmatprep.subr.mxu0 %v2027
    %v2029 = vand.u32 %v169, 4294901760
    %v2030 = vsub.f32 %v169, %v2029
    %v2031 = vand.u32 %v2030, 4294901760
    %v2032 = vsub.f32 %v2030, %v2031
    %v2033 = vand.u32 %v2032, 4294901760
    %2034 = vmatpush1.msra.mxu0 %v2033
    %v2035 = vand.u32 %v172, 4294901760
    %v2036 = vsub.f32 %v172, %v2035
    %v2037 = vand.u32 %v2036, 4294901760
    %v2038 = vsub.f32 %v2036, %v2037
    %v2039 = vand.u32 %v2038, 4294901760
    %2040 = vmatprep.subr.mxu0 %v2039
    %v2041 = vand.u32 %v171, 4294901760
    %v2042 = vsub.f32 %v171, %v2041
    %v2043 = vand.u32 %v2042, 4294901760
    %v2044 = vsub.f32 %v2042, %v2043
    %v2045 = vand.u32 %v2044, 4294901760
    %2046 = vmatpush1.msra.mxu0 %v2045
    %v2047 = vand.u32 %v174, 4294901760
    %v2048 = vsub.f32 %v174, %v2047
    %v2049 = vand.u32 %v2048, 4294901760
    %v2050 = vsub.f32 %v2048, %v2049
    %v2051 = vand.u32 %v2050, 4294901760
    %2052 = vmatprep.subr.mxu0 %v2051
    %v2053 = vand.u32 %v173, 4294901760
    %v2054 = vsub.f32 %v173, %v2053
    %v2055 = vand.u32 %v2054, 4294901760
    %v2056 = vsub.f32 %v2054, %v2055
    %v2057 = vand.u32 %v2056, 4294901760
    %2058 = vmatpush1.msra.mxu0 %v2057
    %v2059 = vand.u32 %v176, 4294901760
    %v2060 = vsub.f32 %v176, %v2059
    %v2061 = vand.u32 %v2060, 4294901760
    %v2062 = vsub.f32 %v2060, %v2061
    %v2063 = vand.u32 %v2062, 4294901760
    %2064 = vmatprep.subr.mxu0 %v2063
    %v2065 = vand.u32 %v175, 4294901760
    %v2066 = vsub.f32 %v175, %v2065
    %v2067 = vand.u32 %v2066, 4294901760
    %v2068 = vsub.f32 %v2066, %v2067
    %v2069 = vand.u32 %v2068, 4294901760
    %2070 = vmatpush1.msra.mxu0 %v2069
    %v2071 = vand.u32 %v1539, 4294901760
    %2072 = vmatprep.mubr.f32.mxu0 %v2071
    %v2073 = vand.u32 %v1538, 4294901760
    %2074 = vmatmul.mubr.f32.gmra.mrb[0].mxu0 %v2073
    %v2075 = vpop.f32.mrb[0].mxu0
    %v2076 = vadd.f32 %v1683, %v2075
    %v2077 = vpop.f32.mrb[0].mxu0
    %v2078 = vadd.f32 %v1685, %v2077
    %2079 = vdwg.mxu0
    %v2080 = vand.u32 %v114, 4294901760
    %v2081 = vsub.f32 %v114, %v2080
    %2082 = vmatprep.subr.mxu0 %v2081
    %v2083 = vand.u32 %v113, 4294901760
    %v2084 = vsub.f32 %v113, %v2083
    %2085 = vmatpush1.msra.mxu0 %v2084
    %v2086 = vand.u32 %v116, 4294901760
    %v2087 = vsub.f32 %v116, %v2086
    %2088 = vmatprep.subr.mxu0 %v2087
    %v2089 = vand.u32 %v115, 4294901760
    %v2090 = vsub.f32 %v115, %v2089
    %2091 = vmatpush1.msra.mxu0 %v2090
    %v2092 = vand.u32 %v118, 4294901760
    %v2093 = vsub.f32 %v118, %v2092
    %2094 = vmatprep.subr.mxu0 %v2093
    %v2095 = vand.u32 %v117, 4294901760
    %v2096 = vsub.f32 %v117, %v2095
    %2097 = vmatpush1.msra.mxu0 %v2096
    %v2098 = vand.u32 %v120, 4294901760
    %v2099 = vsub.f32 %v120, %v2098
    %2100 = vmatprep.subr.mxu0 %v2099
    %v2101 = vand.u32 %v119, 4294901760
    %v2102 = vsub.f32 %v119, %v2101
    %2103 = vmatpush1.msra.mxu0 %v2102
    %v2104 = vand.u32 %v122, 4294901760
    %v2105 = vsub.f32 %v122, %v2104
    %2106 = vmatprep.subr.mxu0 %v2105
    %v2107 = vand.u32 %v121, 4294901760
    %v2108 = vsub.f32 %v121, %v2107
    %2109 = vmatpush1.msra.mxu0 %v2108
    %v2110 = vand.u32 %v124, 4294901760
    %v2111 = vsub.f32 %v124, %v2110
    %2112 = vmatprep.subr.mxu0 %v2111
    %v2113 = vand.u32 %v123, 4294901760
    %v2114 = vsub.f32 %v123, %v2113
    %2115 = vmatpush1.msra.mxu0 %v2114
    %v2116 = vand.u32 %v126, 4294901760
    %v2117 = vsub.f32 %v126, %v2116
    %2118 = vmatprep.subr.mxu0 %v2117
    %v2119 = vand.u32 %v125, 4294901760
    %v2120 = vsub.f32 %v125, %v2119
    %2121 = vmatpush1.msra.mxu0 %v2120
    %v2122 = vand.u32 %v128, 4294901760
    %v2123 = vsub.f32 %v128, %v2122
    %2124 = vmatprep.subr.mxu0 %v2123
    %v2125 = vand.u32 %v127, 4294901760
    %v2126 = vsub.f32 %v127, %v2125
    %2127 = vmatpush1.msra.mxu0 %v2126
    %v2128 = vand.u32 %v130, 4294901760
    %v2129 = vsub.f32 %v130, %v2128
    %2130 = vmatprep.subr.mxu0 %v2129
    %v2131 = vand.u32 %v129, 4294901760
    %v2132 = vsub.f32 %v129, %v2131
    %2133 = vmatpush1.msra.mxu0 %v2132
    %v2134 = vand.u32 %v132, 4294901760
    %v2135 = vsub.f32 %v132, %v2134
    %2136 = vmatprep.subr.mxu0 %v2135
    %v2137 = vand.u32 %v131, 4294901760
    %v2138 = vsub.f32 %v131, %v2137
    %2139 = vmatpush1.msra.mxu0 %v2138
    %v2140 = vand.u32 %v134, 4294901760
    %v2141 = vsub.f32 %v134, %v2140
    %2142 = vmatprep.subr.mxu0 %v2141
    %v2143 = vand.u32 %v133, 4294901760
    %v2144 = vsub.f32 %v133, %v2143
    %2145 = vmatpush1.msra.mxu0 %v2144
    %v2146 = vand.u32 %v136, 4294901760
    %v2147 = vsub.f32 %v136, %v2146
    %2148 = vmatprep.subr.mxu0 %v2147
    %v2149 = vand.u32 %v135, 4294901760
    %v2150 = vsub.f32 %v135, %v2149
    %2151 = vmatpush1.msra.mxu0 %v2150
    %v2152 = vand.u32 %v138, 4294901760
    %v2153 = vsub.f32 %v138, %v2152
    %2154 = vmatprep.subr.mxu0 %v2153
    %v2155 = vand.u32 %v137, 4294901760
    %v2156 = vsub.f32 %v137, %v2155
    %2157 = vmatpush1.msra.mxu0 %v2156
    %v2158 = vand.u32 %v140, 4294901760
    %v2159 = vsub.f32 %v140, %v2158
    %2160 = vmatprep.subr.mxu0 %v2159
    %v2161 = vand.u32 %v139, 4294901760
    %v2162 = vsub.f32 %v139, %v2161
    %2163 = vmatpush1.msra.mxu0 %v2162
    %v2164 = vand.u32 %v142, 4294901760
    %v2165 = vsub.f32 %v142, %v2164
    %2166 = vmatprep.subr.mxu0 %v2165
    %v2167 = vand.u32 %v141, 4294901760
    %v2168 = vsub.f32 %v141, %v2167
    %2169 = vmatpush1.msra.mxu0 %v2168
    %v2170 = vand.u32 %v144, 4294901760
    %v2171 = vsub.f32 %v144, %v2170
    %2172 = vmatprep.subr.mxu0 %v2171
    %v2173 = vand.u32 %v143, 4294901760
    %v2174 = vsub.f32 %v143, %v2173
    %2175 = vmatpush1.msra.mxu0 %v2174
    %v2176 = vand.u32 %v146, 4294901760
    %v2177 = vsub.f32 %v146, %v2176
    %2178 = vmatprep.subr.mxu0 %v2177
    %v2179 = vand.u32 %v145, 4294901760
    %v2180 = vsub.f32 %v145, %v2179
    %2181 = vmatpush1.msra.mxu0 %v2180
    %v2182 = vand.u32 %v148, 4294901760
    %v2183 = vsub.f32 %v148, %v2182
    %2184 = vmatprep.subr.mxu0 %v2183
    %v2185 = vand.u32 %v147, 4294901760
    %v2186 = vsub.f32 %v147, %v2185
    %2187 = vmatpush1.msra.mxu0 %v2186
    %v2188 = vand.u32 %v150, 4294901760
    %v2189 = vsub.f32 %v150, %v2188
    %2190 = vmatprep.subr.mxu0 %v2189
    %v2191 = vand.u32 %v149, 4294901760
    %v2192 = vsub.f32 %v149, %v2191
    %2193 = vmatpush1.msra.mxu0 %v2192
    %v2194 = vand.u32 %v152, 4294901760
    %v2195 = vsub.f32 %v152, %v2194
    %2196 = vmatprep.subr.mxu0 %v2195
    %v2197 = vand.u32 %v151, 4294901760
    %v2198 = vsub.f32 %v151, %v2197
    %2199 = vmatpush1.msra.mxu0 %v2198
    %v2200 = vand.u32 %v154, 4294901760
    %v2201 = vsub.f32 %v154, %v2200
    %2202 = vmatprep.subr.mxu0 %v2201
    %v2203 = vand.u32 %v153, 4294901760
    %v2204 = vsub.f32 %v153, %v2203
    %2205 = vmatpush1.msra.mxu0 %v2204
    %v2206 = vand.u32 %v156, 4294901760
    %v2207 = vsub.f32 %v156, %v2206
    %2208 = vmatprep.subr.mxu0 %v2207
    %v2209 = vand.u32 %v155, 4294901760
    %v2210 = vsub.f32 %v155, %v2209
    %2211 = vmatpush1.msra.mxu0 %v2210
    %v2212 = vand.u32 %v158, 4294901760
    %v2213 = vsub.f32 %v158, %v2212
    %2214 = vmatprep.subr.mxu0 %v2213
    %v2215 = vand.u32 %v157, 4294901760
    %v2216 = vsub.f32 %v157, %v2215
    %2217 = vmatpush1.msra.mxu0 %v2216
    %v2218 = vand.u32 %v160, 4294901760
    %v2219 = vsub.f32 %v160, %v2218
    %2220 = vmatprep.subr.mxu0 %v2219
    %v2221 = vand.u32 %v159, 4294901760
    %v2222 = vsub.f32 %v159, %v2221
    %2223 = vmatpush1.msra.mxu0 %v2222
    %v2224 = vand.u32 %v162, 4294901760
    %v2225 = vsub.f32 %v162, %v2224
    %2226 = vmatprep.subr.mxu0 %v2225
    %v2227 = vand.u32 %v161, 4294901760
    %v2228 = vsub.f32 %v161, %v2227
    %2229 = vmatpush1.msra.mxu0 %v2228
    %v2230 = vand.u32 %v164, 4294901760
    %v2231 = vsub.f32 %v164, %v2230
    %2232 = vmatprep.subr.mxu0 %v2231
    %v2233 = vand.u32 %v163, 4294901760
    %v2234 = vsub.f32 %v163, %v2233
    %2235 = vmatpush1.msra.mxu0 %v2234
    %v2236 = vand.u32 %v166, 4294901760
    %v2237 = vsub.f32 %v166, %v2236
    %2238 = vmatprep.subr.mxu0 %v2237
    %v2239 = vand.u32 %v165, 4294901760
    %v2240 = vsub.f32 %v165, %v2239
    %2241 = vmatpush1.msra.mxu0 %v2240
    %v2242 = vand.u32 %v168, 4294901760
    %v2243 = vsub.f32 %v168, %v2242
    %2244 = vmatprep.subr.mxu0 %v2243
    %v2245 = vand.u32 %v167, 4294901760
    %v2246 = vsub.f32 %v167, %v2245
    %2247 = vmatpush1.msra.mxu0 %v2246
    %v2248 = vand.u32 %v170, 4294901760
    %v2249 = vsub.f32 %v170, %v2248
    %2250 = vmatprep.subr.mxu0 %v2249
    %v2251 = vand.u32 %v169, 4294901760
    %v2252 = vsub.f32 %v169, %v2251
    %2253 = vmatpush1.msra.mxu0 %v2252
    %v2254 = vand.u32 %v172, 4294901760
    %v2255 = vsub.f32 %v172, %v2254
    %2256 = vmatprep.subr.mxu0 %v2255
    %v2257 = vand.u32 %v171, 4294901760
    %v2258 = vsub.f32 %v171, %v2257
    %2259 = vmatpush1.msra.mxu0 %v2258
    %v2260 = vand.u32 %v174, 4294901760
    %v2261 = vsub.f32 %v174, %v2260
    %2262 = vmatprep.subr.mxu0 %v2261
    %v2263 = vand.u32 %v173, 4294901760
    %v2264 = vsub.f32 %v173, %v2263
    %2265 = vmatpush1.msra.mxu0 %v2264
    %v2266 = vand.u32 %v176, 4294901760
    %v2267 = vsub.f32 %v176, %v2266
    %2268 = vmatprep.subr.mxu0 %v2267
    %v2269 = vand.u32 %v175, 4294901760
    %v2270 = vsub.f32 %v175, %v2269
    %2271 = vmatpush1.msra.mxu0 %v2270
    %v2272 = vand.u32 %v1539, 4294901760
    %v2273 = vsub.f32 %v1539, %v2272
    %2274 = vmatprep.mubr.f32.mxu0 %v2273
    %v2275 = vand.u32 %v1538, 4294901760
    %v2276 = vsub.f32 %v1538, %v2275
    %2277 = vmatmul.mubr.f32.gmra.mrb[0].mxu0 %v2276
    %v2278 = vpop.f32.mrb[0].mxu0
    %v2279 = vadd.f32 %v2076, %v2278
    %v2280 = vpop.f32.mrb[0].mxu0
    %v2281 = vadd.f32 %v2078, %v2280
    %2282 = vdwg.mxu0
    %v2283 = vand.u32 %v114, 4294901760
    %2284 = vmatprep.subr.mxu0 %v2283
    %v2285 = vand.u32 %v113, 4294901760
    %2286 = vmatpush1.msra.mxu0 %v2285
    %v2287 = vand.u32 %v116, 4294901760
    %2288 = vmatprep.subr.mxu0 %v2287
    %v2289 = vand.u32 %v115, 4294901760
    %2290 = vmatpush1.msra.mxu0 %v2289
    %v2291 = vand.u32 %v118, 4294901760
    %2292 = vmatprep.subr.mxu0 %v2291
    %v2293 = vand.u32 %v117, 4294901760
    %2294 = vmatpush1.msra.mxu0 %v2293
    %v2295 = vand.u32 %v120, 4294901760
    %2296 = vmatprep.subr.mxu0 %v2295
    %v2297 = vand.u32 %v119, 4294901760
    %2298 = vmatpush1.msra.mxu0 %v2297
    %v2299 = vand.u32 %v122, 4294901760
    %2300 = vmatprep.subr.mxu0 %v2299
    %v2301 = vand.u32 %v121, 4294901760
    %2302 = vmatpush1.msra.mxu0 %v2301
    %v2303 = vand.u32 %v124, 4294901760
    %2304 = vmatprep.subr.mxu0 %v2303
    %v2305 = vand.u32 %v123, 4294901760
    %2306 = vmatpush1.msra.mxu0 %v2305
    %v2307 = vand.u32 %v126, 4294901760
    %2308 = vmatprep.subr.mxu0 %v2307
    %v2309 = vand.u32 %v125, 4294901760
    %2310 = vmatpush1.msra.mxu0 %v2309
    %v2311 = vand.u32 %v128, 4294901760
    %2312 = vmatprep.subr.mxu0 %v2311
    %v2313 = vand.u32 %v127, 4294901760
    %2314 = vmatpush1.msra.mxu0 %v2313
    %v2315 = vand.u32 %v130, 4294901760
    %2316 = vmatprep.subr.mxu0 %v2315
    %v2317 = vand.u32 %v129, 4294901760
    %2318 = vmatpush1.msra.mxu0 %v2317
    %v2319 = vand.u32 %v132, 4294901760
    %2320 = vmatprep.subr.mxu0 %v2319
    %v2321 = vand.u32 %v131, 4294901760
    %2322 = vmatpush1.msra.mxu0 %v2321
    %v2323 = vand.u32 %v134, 4294901760
    %2324 = vmatprep.subr.mxu0 %v2323
    %v2325 = vand.u32 %v133, 4294901760
    %2326 = vmatpush1.msra.mxu0 %v2325
    %v2327 = vand.u32 %v136, 4294901760
    %2328 = vmatprep.subr.mxu0 %v2327
    %v2329 = vand.u32 %v135, 4294901760
    %2330 = vmatpush1.msra.mxu0 %v2329
    %v2331 = vand.u32 %v138, 4294901760
    %2332 = vmatprep.subr.mxu0 %v2331
    %v2333 = vand.u32 %v137, 4294901760
    %2334 = vmatpush1.msra.mxu0 %v2333
    %v2335 = vand.u32 %v140, 4294901760
    %2336 = vmatprep.subr.mxu0 %v2335
    %v2337 = vand.u32 %v139, 4294901760
    %2338 = vmatpush1.msra.mxu0 %v2337
    %v2339 = vand.u32 %v142, 4294901760
    %2340 = vmatprep.subr.mxu0 %v2339
    %v2341 = vand.u32 %v141, 4294901760
    %2342 = vmatpush1.msra.mxu0 %v2341
    %v2343 = vand.u32 %v144, 4294901760
    %2344 = vmatprep.subr.mxu0 %v2343
    %v2345 = vand.u32 %v143, 4294901760
    %2346 = vmatpush1.msra.mxu0 %v2345
    %v2347 = vand.u32 %v146, 4294901760
    %2348 = vmatprep.subr.mxu0 %v2347
    %v2349 = vand.u32 %v145, 4294901760
    %2350 = vmatpush1.msra.mxu0 %v2349
    %v2351 = vand.u32 %v148, 4294901760
    %2352 = vmatprep.subr.mxu0 %v2351
    %v2353 = vand.u32 %v147, 4294901760
    %2354 = vmatpush1.msra.mxu0 %v2353
    %v2355 = vand.u32 %v150, 4294901760
    %2356 = vmatprep.subr.mxu0 %v2355
    %v2357 = vand.u32 %v149, 4294901760
    %2358 = vmatpush1.msra.mxu0 %v2357
    %v2359 = vand.u32 %v152, 4294901760
    %2360 = vmatprep.subr.mxu0 %v2359
    %v2361 = vand.u32 %v151, 4294901760
    %2362 = vmatpush1.msra.mxu0 %v2361
    %v2363 = vand.u32 %v154, 4294901760
    %2364 = vmatprep.subr.mxu0 %v2363
    %v2365 = vand.u32 %v153, 4294901760
    %2366 = vmatpush1.msra.mxu0 %v2365
    %v2367 = vand.u32 %v156, 4294901760
    %2368 = vmatprep.subr.mxu0 %v2367
    %v2369 = vand.u32 %v155, 4294901760
    %2370 = vmatpush1.msra.mxu0 %v2369
    %v2371 = vand.u32 %v158, 4294901760
    %2372 = vmatprep.subr.mxu0 %v2371
    %v2373 = vand.u32 %v157, 4294901760
    %2374 = vmatpush1.msra.mxu0 %v2373
    %v2375 = vand.u32 %v160, 4294901760
    %2376 = vmatprep.subr.mxu0 %v2375
    %v2377 = vand.u32 %v159, 4294901760
    %2378 = vmatpush1.msra.mxu0 %v2377
    %v2379 = vand.u32 %v162, 4294901760
    %2380 = vmatprep.subr.mxu0 %v2379
    %v2381 = vand.u32 %v161, 4294901760
    %2382 = vmatpush1.msra.mxu0 %v2381
    %v2383 = vand.u32 %v164, 4294901760
    %2384 = vmatprep.subr.mxu0 %v2383
    %v2385 = vand.u32 %v163, 4294901760
    %2386 = vmatpush1.msra.mxu0 %v2385
    %v2387 = vand.u32 %v166, 4294901760
    %2388 = vmatprep.subr.mxu0 %v2387
    %v2389 = vand.u32 %v165, 4294901760
    %2390 = vmatpush1.msra.mxu0 %v2389
    %v2391 = vand.u32 %v168, 4294901760
    %2392 = vmatprep.subr.mxu0 %v2391
    %v2393 = vand.u32 %v167, 4294901760
    %2394 = vmatpush1.msra.mxu0 %v2393
    %v2395 = vand.u32 %v170, 4294901760
    %2396 = vmatprep.subr.mxu0 %v2395
    %v2397 = vand.u32 %v169, 4294901760
    %2398 = vmatpush1.msra.mxu0 %v2397
    %v2399 = vand.u32 %v172, 4294901760
    %2400 = vmatprep.subr.mxu0 %v2399
    %v2401 = vand.u32 %v171, 4294901760
    %2402 = vmatpush1.msra.mxu0 %v2401
    %v2403 = vand.u32 %v174, 4294901760
    %2404 = vmatprep.subr.mxu0 %v2403
    %v2405 = vand.u32 %v173, 4294901760
    %2406 = vmatpush1.msra.mxu0 %v2405
    %v2407 = vand.u32 %v176, 4294901760
    %2408 = vmatprep.subr.mxu0 %v2407
    %v2409 = vand.u32 %v175, 4294901760
    %2410 = vmatpush1.msra.mxu0 %v2409
    %v2411 = vand.u32 %v1539, 4294901760
    %v2412 = vsub.f32 %v1539, %v2411
    %v2413 = vand.u32 %v2412, 4294901760
    %2414 = vmatprep.mubr.f32.mxu0 %v2413
    %v2415 = vand.u32 %v1538, 4294901760
    %v2416 = vsub.f32 %v1538, %v2415
    %v2417 = vand.u32 %v2416, 4294901760
    %2418 = vmatmul.mubr.f32.gmra.mrb[0].mxu0 %v2417
    %v2419 = vpop.f32.mrb[0].mxu0
    %v2420 = vadd.f32 %v2279, %v2419
    %v2421 = vpop.f32.mrb[0].mxu0
    %v2422 = vadd.f32 %v2281, %v2421
    %2423 = vdwg.mxu0
    %v2424 = vand.u32 %v114, 4294901760
    %v2425 = vsub.f32 %v114, %v2424
    %v2426 = vand.u32 %v2425, 4294901760
    %2427 = vmatprep.subr.mxu0 %v2426
    %v2428 = vand.u32 %v113, 4294901760
    %v2429 = vsub.f32 %v113, %v2428
    %v2430 = vand.u32 %v2429, 4294901760
    %2431 = vmatpush1.msra.mxu0 %v2430
    %v2432 = vand.u32 %v116, 4294901760
    %v2433 = vsub.f32 %v116, %v2432
    %v2434 = vand.u32 %v2433, 4294901760
    %2435 = vmatprep.subr.mxu0 %v2434
    %v2436 = vand.u32 %v115, 4294901760
    %v2437 = vsub.f32 %v115, %v2436
    %v2438 = vand.u32 %v2437, 4294901760
    %2439 = vmatpush1.msra.mxu0 %v2438
    %v2440 = vand.u32 %v118, 4294901760
    %v2441 = vsub.f32 %v118, %v2440
    %v2442 = vand.u32 %v2441, 4294901760
    %2443 = vmatprep.subr.mxu0 %v2442
    %v2444 = vand.u32 %v117, 4294901760
    %v2445 = vsub.f32 %v117, %v2444
    %v2446 = vand.u32 %v2445, 4294901760
    %2447 = vmatpush1.msra.mxu0 %v2446
    %v2448 = vand.u32 %v120, 4294901760
    %v2449 = vsub.f32 %v120, %v2448
    %v2450 = vand.u32 %v2449, 4294901760
    %2451 = vmatprep.subr.mxu0 %v2450
    %v2452 = vand.u32 %v119, 4294901760
    %v2453 = vsub.f32 %v119, %v2452
    %v2454 = vand.u32 %v2453, 4294901760
    %2455 = vmatpush1.msra.mxu0 %v2454
    %v2456 = vand.u32 %v122, 4294901760
    %v2457 = vsub.f32 %v122, %v2456
    %v2458 = vand.u32 %v2457, 4294901760
    %2459 = vmatprep.subr.mxu0 %v2458
    %v2460 = vand.u32 %v121, 4294901760
    %v2461 = vsub.f32 %v121, %v2460
    %v2462 = vand.u32 %v2461, 4294901760
    %2463 = vmatpush1.msra.mxu0 %v2462
    %v2464 = vand.u32 %v124, 4294901760
    %v2465 = vsub.f32 %v124, %v2464
    %v2466 = vand.u32 %v2465, 4294901760
    %2467 = vmatprep.subr.mxu0 %v2466
    %v2468 = vand.u32 %v123, 4294901760
    %v2469 = vsub.f32 %v123, %v2468
    %v2470 = vand.u32 %v2469, 4294901760
    %2471 = vmatpush1.msra.mxu0 %v2470
    %v2472 = vand.u32 %v126, 4294901760
    %v2473 = vsub.f32 %v126, %v2472
    %v2474 = vand.u32 %v2473, 4294901760
    %2475 = vmatprep.subr.mxu0 %v2474
    %v2476 = vand.u32 %v125, 4294901760
    %v2477 = vsub.f32 %v125, %v2476
    %v2478 = vand.u32 %v2477, 4294901760
    %2479 = vmatpush1.msra.mxu0 %v2478
    %v2480 = vand.u32 %v128, 4294901760
    %v2481 = vsub.f32 %v128, %v2480
    %v2482 = vand.u32 %v2481, 4294901760
    %2483 = vmatprep.subr.mxu0 %v2482
    %v2484 = vand.u32 %v127, 4294901760
    %v2485 = vsub.f32 %v127, %v2484
    %v2486 = vand.u32 %v2485, 4294901760
    %2487 = vmatpush1.msra.mxu0 %v2486
    %v2488 = vand.u32 %v130, 4294901760
    %v2489 = vsub.f32 %v130, %v2488
    %v2490 = vand.u32 %v2489, 4294901760
    %2491 = vmatprep.subr.mxu0 %v2490
    %v2492 = vand.u32 %v129, 4294901760
    %v2493 = vsub.f32 %v129, %v2492
    %v2494 = vand.u32 %v2493, 4294901760
    %2495 = vmatpush1.msra.mxu0 %v2494
    %v2496 = vand.u32 %v132, 4294901760
    %v2497 = vsub.f32 %v132, %v2496
    %v2498 = vand.u32 %v2497, 4294901760
    %2499 = vmatprep.subr.mxu0 %v2498
    %v2500 = vand.u32 %v131, 4294901760
    %v2501 = vsub.f32 %v131, %v2500
    %v2502 = vand.u32 %v2501, 4294901760
    %2503 = vmatpush1.msra.mxu0 %v2502
    %v2504 = vand.u32 %v134, 4294901760
    %v2505 = vsub.f32 %v134, %v2504
    %v2506 = vand.u32 %v2505, 4294901760
    %2507 = vmatprep.subr.mxu0 %v2506
    %v2508 = vand.u32 %v133, 4294901760
    %v2509 = vsub.f32 %v133, %v2508
    %v2510 = vand.u32 %v2509, 4294901760
    %2511 = vmatpush1.msra.mxu0 %v2510
    %v2512 = vand.u32 %v136, 4294901760
    %v2513 = vsub.f32 %v136, %v2512
    %v2514 = vand.u32 %v2513, 4294901760
    %2515 = vmatprep.subr.mxu0 %v2514
    %v2516 = vand.u32 %v135, 4294901760
    %v2517 = vsub.f32 %v135, %v2516
    %v2518 = vand.u32 %v2517, 4294901760
    %2519 = vmatpush1.msra.mxu0 %v2518
    %v2520 = vand.u32 %v138, 4294901760
    %v2521 = vsub.f32 %v138, %v2520
    %v2522 = vand.u32 %v2521, 4294901760
    %2523 = vmatprep.subr.mxu0 %v2522
    %v2524 = vand.u32 %v137, 4294901760
    %v2525 = vsub.f32 %v137, %v2524
    %v2526 = vand.u32 %v2525, 4294901760
    %2527 = vmatpush1.msra.mxu0 %v2526
    %v2528 = vand.u32 %v140, 4294901760
    %v2529 = vsub.f32 %v140, %v2528
    %v2530 = vand.u32 %v2529, 4294901760
    %2531 = vmatprep.subr.mxu0 %v2530
    %v2532 = vand.u32 %v139, 4294901760
    %v2533 = vsub.f32 %v139, %v2532
    %v2534 = vand.u32 %v2533, 4294901760
    %2535 = vmatpush1.msra.mxu0 %v2534
    %v2536 = vand.u32 %v142, 4294901760
    %v2537 = vsub.f32 %v142, %v2536
    %v2538 = vand.u32 %v2537, 4294901760
    %2539 = vmatprep.subr.mxu0 %v2538
    %v2540 = vand.u32 %v141, 4294901760
    %v2541 = vsub.f32 %v141, %v2540
    %v2542 = vand.u32 %v2541, 4294901760
    %2543 = vmatpush1.msra.mxu0 %v2542
    %v2544 = vand.u32 %v144, 4294901760
    %v2545 = vsub.f32 %v144, %v2544
    %v2546 = vand.u32 %v2545, 4294901760
    %2547 = vmatprep.subr.mxu0 %v2546
    %v2548 = vand.u32 %v143, 4294901760
    %v2549 = vsub.f32 %v143, %v2548
    %v2550 = vand.u32 %v2549, 4294901760
    %2551 = vmatpush1.msra.mxu0 %v2550
    %v2552 = vand.u32 %v146, 4294901760
    %v2553 = vsub.f32 %v146, %v2552
    %v2554 = vand.u32 %v2553, 4294901760
    %2555 = vmatprep.subr.mxu0 %v2554
    %v2556 = vand.u32 %v145, 4294901760
    %v2557 = vsub.f32 %v145, %v2556
    %v2558 = vand.u32 %v2557, 4294901760
    %2559 = vmatpush1.msra.mxu0 %v2558
    %v2560 = vand.u32 %v148, 4294901760
    %v2561 = vsub.f32 %v148, %v2560
    %v2562 = vand.u32 %v2561, 4294901760
    %2563 = vmatprep.subr.mxu0 %v2562
    %v2564 = vand.u32 %v147, 4294901760
    %v2565 = vsub.f32 %v147, %v2564
    %v2566 = vand.u32 %v2565, 4294901760
    %2567 = vmatpush1.msra.mxu0 %v2566
    %v2568 = vand.u32 %v150, 4294901760
    %v2569 = vsub.f32 %v150, %v2568
    %v2570 = vand.u32 %v2569, 4294901760
    %2571 = vmatprep.subr.mxu0 %v2570
    %v2572 = vand.u32 %v149, 4294901760
    %v2573 = vsub.f32 %v149, %v2572
    %v2574 = vand.u32 %v2573, 4294901760
    %2575 = vmatpush1.msra.mxu0 %v2574
    %v2576 = vand.u32 %v152, 4294901760
    %v2577 = vsub.f32 %v152, %v2576
    %v2578 = vand.u32 %v2577, 4294901760
    %2579 = vmatprep.subr.mxu0 %v2578
    %v2580 = vand.u32 %v151, 4294901760
    %v2581 = vsub.f32 %v151, %v2580
    %v2582 = vand.u32 %v2581, 4294901760
    %2583 = vmatpush1.msra.mxu0 %v2582
    %v2584 = vand.u32 %v154, 4294901760
    %v2585 = vsub.f32 %v154, %v2584
    %v2586 = vand.u32 %v2585, 4294901760
    %2587 = vmatprep.subr.mxu0 %v2586
    %v2588 = vand.u32 %v153, 4294901760
    %v2589 = vsub.f32 %v153, %v2588
    %v2590 = vand.u32 %v2589, 4294901760
    %2591 = vmatpush1.msra.mxu0 %v2590
    %v2592 = vand.u32 %v156, 4294901760
    %v2593 = vsub.f32 %v156, %v2592
    %v2594 = vand.u32 %v2593, 4294901760
    %2595 = vmatprep.subr.mxu0 %v2594
    %v2596 = vand.u32 %v155, 4294901760
    %v2597 = vsub.f32 %v155, %v2596
    %v2598 = vand.u32 %v2597, 4294901760
    %2599 = vmatpush1.msra.mxu0 %v2598
    %v2600 = vand.u32 %v158, 4294901760
    %v2601 = vsub.f32 %v158, %v2600
    %v2602 = vand.u32 %v2601, 4294901760
    %2603 = vmatprep.subr.mxu0 %v2602
    %v2604 = vand.u32 %v157, 4294901760
    %v2605 = vsub.f32 %v157, %v2604
    %v2606 = vand.u32 %v2605, 4294901760
    %2607 = vmatpush1.msra.mxu0 %v2606
    %v2608 = vand.u32 %v160, 4294901760
    %v2609 = vsub.f32 %v160, %v2608
    %v2610 = vand.u32 %v2609, 4294901760
    %2611 = vmatprep.subr.mxu0 %v2610
    %v2612 = vand.u32 %v159, 4294901760
    %v2613 = vsub.f32 %v159, %v2612
    %v2614 = vand.u32 %v2613, 4294901760
    %2615 = vmatpush1.msra.mxu0 %v2614
    %v2616 = vand.u32 %v162, 4294901760
    %v2617 = vsub.f32 %v162, %v2616
    %v2618 = vand.u32 %v2617, 4294901760
    %2619 = vmatprep.subr.mxu0 %v2618
    %v2620 = vand.u32 %v161, 4294901760
    %v2621 = vsub.f32 %v161, %v2620
    %v2622 = vand.u32 %v2621, 4294901760
    %2623 = vmatpush1.msra.mxu0 %v2622
    %v2624 = vand.u32 %v164, 4294901760
    %v2625 = vsub.f32 %v164, %v2624
    %v2626 = vand.u32 %v2625, 4294901760
    %2627 = vmatprep.subr.mxu0 %v2626
    %v2628 = vand.u32 %v163, 4294901760
    %v2629 = vsub.f32 %v163, %v2628
    %v2630 = vand.u32 %v2629, 4294901760
    %2631 = vmatpush1.msra.mxu0 %v2630
    %v2632 = vand.u32 %v166, 4294901760
    %v2633 = vsub.f32 %v166, %v2632
    %v2634 = vand.u32 %v2633, 4294901760
    %2635 = vmatprep.subr.mxu0 %v2634
    %v2636 = vand.u32 %v165, 4294901760
    %v2637 = vsub.f32 %v165, %v2636
    %v2638 = vand.u32 %v2637, 4294901760
    %2639 = vmatpush1.msra.mxu0 %v2638
    %v2640 = vand.u32 %v168, 4294901760
    %v2641 = vsub.f32 %v168, %v2640
    %v2642 = vand.u32 %v2641, 4294901760
    %2643 = vmatprep.subr.mxu0 %v2642
    %v2644 = vand.u32 %v167, 4294901760
    %v2645 = vsub.f32 %v167, %v2644
    %v2646 = vand.u32 %v2645, 4294901760
    %2647 = vmatpush1.msra.mxu0 %v2646
    %v2648 = vand.u32 %v170, 4294901760
    %v2649 = vsub.f32 %v170, %v2648
    %v2650 = vand.u32 %v2649, 4294901760
    %2651 = vmatprep.subr.mxu0 %v2650
    %v2652 = vand.u32 %v169, 4294901760
    %v2653 = vsub.f32 %v169, %v2652
    %v2654 = vand.u32 %v2653, 4294901760
    %2655 = vmatpush1.msra.mxu0 %v2654
    %v2656 = vand.u32 %v172, 4294901760
    %v2657 = vsub.f32 %v172, %v2656
    %v2658 = vand.u32 %v2657, 4294901760
    %2659 = vmatprep.subr.mxu0 %v2658
    %v2660 = vand.u32 %v171, 4294901760
    %v2661 = vsub.f32 %v171, %v2660
    %v2662 = vand.u32 %v2661, 4294901760
    %2663 = vmatpush1.msra.mxu0 %v2662
    %v2664 = vand.u32 %v174, 4294901760
    %v2665 = vsub.f32 %v174, %v2664
    %v2666 = vand.u32 %v2665, 4294901760
    %2667 = vmatprep.subr.mxu0 %v2666
    %v2668 = vand.u32 %v173, 4294901760
    %v2669 = vsub.f32 %v173, %v2668
    %v2670 = vand.u32 %v2669, 4294901760
    %2671 = vmatpush1.msra.mxu0 %v2670
    %v2672 = vand.u32 %v176, 4294901760
    %v2673 = vsub.f32 %v176, %v2672
    %v2674 = vand.u32 %v2673, 4294901760
    %2675 = vmatprep.subr.mxu0 %v2674
    %v2676 = vand.u32 %v175, 4294901760
    %v2677 = vsub.f32 %v175, %v2676
    %v2678 = vand.u32 %v2677, 4294901760
    %2679 = vmatpush1.msra.mxu0 %v2678
    %v2680 = vand.u32 %v1539, 4294901760
    %2681 = vmatprep.mubr.f32.mxu0 %v2680
    %v2682 = vand.u32 %v1538, 4294901760
    %2683 = vmatmul.mubr.f32.gmra.mrb[0].mxu0 %v2682
    %v2684 = vpop.f32.mrb[0].mxu0
    %v2685 = vadd.f32 %v2420, %v2684
    %v2686 = vpop.f32.mrb[0].mxu0
    %v2687 = vadd.f32 %v2422, %v2686
    %2688 = vdwg.mxu0
    %v2689 = vand.u32 %v114, 4294901760
    %2690 = vmatprep.subr.mxu0 %v2689
    %v2691 = vand.u32 %v113, 4294901760
    %2692 = vmatpush1.msra.mxu0 %v2691
    %v2693 = vand.u32 %v116, 4294901760
    %2694 = vmatprep.subr.mxu0 %v2693
    %v2695 = vand.u32 %v115, 4294901760
    %2696 = vmatpush1.msra.mxu0 %v2695
    %v2697 = vand.u32 %v118, 4294901760
    %2698 = vmatprep.subr.mxu0 %v2697
    %v2699 = vand.u32 %v117, 4294901760
    %2700 = vmatpush1.msra.mxu0 %v2699
    %v2701 = vand.u32 %v120, 4294901760
    %2702 = vmatprep.subr.mxu0 %v2701
    %v2703 = vand.u32 %v119, 4294901760
    %2704 = vmatpush1.msra.mxu0 %v2703
    %v2705 = vand.u32 %v122, 4294901760
    %2706 = vmatprep.subr.mxu0 %v2705
    %v2707 = vand.u32 %v121, 4294901760
    %2708 = vmatpush1.msra.mxu0 %v2707
    %v2709 = vand.u32 %v124, 4294901760
    %2710 = vmatprep.subr.mxu0 %v2709
    %v2711 = vand.u32 %v123, 4294901760
    %2712 = vmatpush1.msra.mxu0 %v2711
    %v2713 = vand.u32 %v126, 4294901760
    %2714 = vmatprep.subr.mxu0 %v2713
    %v2715 = vand.u32 %v125, 4294901760
    %2716 = vmatpush1.msra.mxu0 %v2715
    %v2717 = vand.u32 %v128, 4294901760
    %2718 = vmatprep.subr.mxu0 %v2717
    %v2719 = vand.u32 %v127, 4294901760
    %2720 = vmatpush1.msra.mxu0 %v2719
    %v2721 = vand.u32 %v130, 4294901760
    %2722 = vmatprep.subr.mxu0 %v2721
    %v2723 = vand.u32 %v129, 4294901760
    %2724 = vmatpush1.msra.mxu0 %v2723
    %v2725 = vand.u32 %v132, 4294901760
    %2726 = vmatprep.subr.mxu0 %v2725
    %v2727 = vand.u32 %v131, 4294901760
    %2728 = vmatpush1.msra.mxu0 %v2727
    %v2729 = vand.u32 %v134, 4294901760
    %2730 = vmatprep.subr.mxu0 %v2729
    %v2731 = vand.u32 %v133, 4294901760
    %2732 = vmatpush1.msra.mxu0 %v2731
    %v2733 = vand.u32 %v136, 4294901760
    %2734 = vmatprep.subr.mxu0 %v2733
    %v2735 = vand.u32 %v135, 4294901760
    %2736 = vmatpush1.msra.mxu0 %v2735
    %v2737 = vand.u32 %v138, 4294901760
    %2738 = vmatprep.subr.mxu0 %v2737
    %v2739 = vand.u32 %v137, 4294901760
    %2740 = vmatpush1.msra.mxu0 %v2739
    %v2741 = vand.u32 %v140, 4294901760
    %2742 = vmatprep.subr.mxu0 %v2741
    %v2743 = vand.u32 %v139, 4294901760
    %2744 = vmatpush1.msra.mxu0 %v2743
    %v2745 = vand.u32 %v142, 4294901760
    %2746 = vmatprep.subr.mxu0 %v2745
    %v2747 = vand.u32 %v141, 4294901760
    %2748 = vmatpush1.msra.mxu0 %v2747
    %v2749 = vand.u32 %v144, 4294901760
    %2750 = vmatprep.subr.mxu0 %v2749
    %v2751 = vand.u32 %v143, 4294901760
    %2752 = vmatpush1.msra.mxu0 %v2751
    %v2753 = vand.u32 %v146, 4294901760
    %2754 = vmatprep.subr.mxu0 %v2753
    %v2755 = vand.u32 %v145, 4294901760
    %2756 = vmatpush1.msra.mxu0 %v2755
    %v2757 = vand.u32 %v148, 4294901760
    %2758 = vmatprep.subr.mxu0 %v2757
    %v2759 = vand.u32 %v147, 4294901760
    %2760 = vmatpush1.msra.mxu0 %v2759
    %v2761 = vand.u32 %v150, 4294901760
    %2762 = vmatprep.subr.mxu0 %v2761
    %v2763 = vand.u32 %v149, 4294901760
    %2764 = vmatpush1.msra.mxu0 %v2763
    %v2765 = vand.u32 %v152, 4294901760
    %2766 = vmatprep.subr.mxu0 %v2765
    %v2767 = vand.u32 %v151, 4294901760
    %2768 = vmatpush1.msra.mxu0 %v2767
    %v2769 = vand.u32 %v154, 4294901760
    %2770 = vmatprep.subr.mxu0 %v2769
    %v2771 = vand.u32 %v153, 4294901760
    %2772 = vmatpush1.msra.mxu0 %v2771
    %v2773 = vand.u32 %v156, 4294901760
    %2774 = vmatprep.subr.mxu0 %v2773
    %v2775 = vand.u32 %v155, 4294901760
    %2776 = vmatpush1.msra.mxu0 %v2775
    %v2777 = vand.u32 %v158, 4294901760
    %2778 = vmatprep.subr.mxu0 %v2777
    %v2779 = vand.u32 %v157, 4294901760
    %2780 = vmatpush1.msra.mxu0 %v2779
    %v2781 = vand.u32 %v160, 4294901760
    %2782 = vmatprep.subr.mxu0 %v2781
    %v2783 = vand.u32 %v159, 4294901760
    %2784 = vmatpush1.msra.mxu0 %v2783
    %v2785 = vand.u32 %v162, 4294901760
    %2786 = vmatprep.subr.mxu0 %v2785
    %v2787 = vand.u32 %v161, 4294901760
    %2788 = vmatpush1.msra.mxu0 %v2787
    %v2789 = vand.u32 %v164, 4294901760
    %2790 = vmatprep.subr.mxu0 %v2789
    %v2791 = vand.u32 %v163, 4294901760
    %2792 = vmatpush1.msra.mxu0 %v2791
    %v2793 = vand.u32 %v166, 4294901760
    %2794 = vmatprep.subr.mxu0 %v2793
    %v2795 = vand.u32 %v165, 4294901760
    %2796 = vmatpush1.msra.mxu0 %v2795
    %v2797 = vand.u32 %v168, 4294901760
    %2798 = vmatprep.subr.mxu0 %v2797
    %v2799 = vand.u32 %v167, 4294901760
    %2800 = vmatpush1.msra.mxu0 %v2799
    %v2801 = vand.u32 %v170, 4294901760
    %2802 = vmatprep.subr.mxu0 %v2801
    %v2803 = vand.u32 %v169, 4294901760
    %2804 = vmatpush1.msra.mxu0 %v2803
    %v2805 = vand.u32 %v172, 4294901760
    %2806 = vmatprep.subr.mxu0 %v2805
    %v2807 = vand.u32 %v171, 4294901760
    %2808 = vmatpush1.msra.mxu0 %v2807
    %v2809 = vand.u32 %v174, 4294901760
    %2810 = vmatprep.subr.mxu0 %v2809
    %v2811 = vand.u32 %v173, 4294901760
    %2812 = vmatpush1.msra.mxu0 %v2811
    %v2813 = vand.u32 %v176, 4294901760
    %2814 = vmatprep.subr.mxu0 %v2813
    %v2815 = vand.u32 %v175, 4294901760
    %2816 = vmatpush1.msra.mxu0 %v2815
    %v2817 = vand.u32 %v1539, 4294901760
    %2818 = vmatprep.mubr.f32.mxu0 %v2817
    %v2819 = vand.u32 %v1538, 4294901760
    %2820 = vmatmul.mubr.f32.gmra.mrb[0].mxu0 %v2819
    %v2821 = vpop.f32.mrb[0].mxu0
    %v2822 = vadd.f32 %v2685, %v2821
    %v2823 = vpop.f32.mrb[0].mxu0
    %v2824 = vadd.f32 %v2687, %v2823
    %2825 = vdwg.mxu0
    %s2826 = sld [smem:[#allocation2]]
    %v2827 = vstv %s2826
    %v2828 = vadd.f32 %v2822, %v2827
    %v2829 = vadd.f32 %v2824, %v2827
    %v2830 = vxor.u32 %v2828, 2147483648
    %v2831 = vxor.u32 %v2829, 2147483648
    %v2832 = vmul.f32 %v2830, 1.442695
    %v2833 = vpow.pop %v2832
    %v2834 = vmul.f32 %v2831, 1.442695
    %v2835 = vpow.pop %v2834
    %v2836 = vadd.f32 %v2833, 1.0
    %v2837 = vadd.f32 %v2835, 1.0
    %v2838 = vrcp.pop %v2836
    %v2839 = vmul.f32 1.0, %v2838
    %v2840 = vrcp.pop %v2837
    %v2841 = vmul.f32 1.0, %v2840
    %v2844 = vcombine.low %v2839, %v2841
    %v2846 = vunpack.c.l.s4 1983009808
    %v2847 = vunpack.c.0.s8 %v2846
    %v2848 = vlaneseq
    %v2849 = vshrl.u32 %v2848, 7
    %v2850 = vsub.s32 %v2847, %v2849
    %v2851 = vrot.slane %v2844, %v2850
    %2853 = vst [vmem:[#allocation8] sm:$0xf] %v2851
    // Predicated region
    $region22: #{tpu_custom_call.1} parent=1 // pred_check
      _
    $region23: #{tpu_custom_call.1} parent=1 // pred_check_branch
      %2855 = sbr.rel (0) target = $region25
    $region24: #{tpu_custom_call.1} parent=1 // pred_region
      %s2857 = ssub.s32 64, 64
      %2858 = vsyncadd [#allocation5], %s2857
      %s2860 = sshll.u32 [#allocation8], 4
      %s2861 = int_to_ptr.vmem [resolvable:$true] %s2860
      %2863 = dma.vmem_to_hbm [thread:$0]  %s2861, 64, %s3, [#allocation5]
    $region25: #{tpu_custom_call.1} parent=1 // pred_fallthru
      _
    // Predicated region
    $region26: #{tpu_custom_call.1} parent=1 // pred_check
      _
    $region27: #{tpu_custom_call.1} parent=1 // pred_check_branch
      %2865 = sbr.rel (0) target = $region29
    $region28: #{tpu_custom_call.1} parent=1 // pred_region
      %2866 = dma.done [#allocation5], 64
    $region29: #{tpu_custom_call.1} parent=1 // pred_fallthru
      _
    %2867 = vsyncpa [#allocation4], 1
    %2868 = vsyncpa [#allocation7], 1
    %2869 = vsyncpa [#allocation5], 1

</llo_original>
